<compile_context>
chip_gen: v5e
topology: v5e:2x2
jax: 0.10.0
libtpu: 0.0.40
codegen_flags: <defaults>
</compile_context>

<pallas_src>
import functools

import jax
import jax.numpy as jnp
from jax.experimental import pallas as pl
from jax.experimental.pallas import tpu as pltpu

# ---- module config ----
IN_CH = 16                 # in_channels (must be >= reduction)
REDUCTION = 8
CR = IN_CH // REDUCTION    # reduced channels = 2 (only appears inside the fold)

N, H, W = 2, 16, 16
HW = H * W                 # 256 -> lane-dense


def pam_kernel(x_ref, m1_ref, wd_ref, wkey_ref, bout_ref, o_ref):
    """One grid step: `nb` batch elements, each a (C, HW) slab (HW on lanes)."""
    nb = x_ref.shape[0]
    m1 = m1_ref[...]        # (C, C)   = Wc^T Wb   (transposed energy form)
    wd = wd_ref[...]        # (C, C)   = alpha * Wd
    wkey = wkey_ref[...]    # (C, 1)   = Wc^T bb   (surviving key-side bias)
    bout = bout_ref[...]    # (C, 1)   = alpha * bd (constant output bias)

    for b in range(nb):     # static unroll, nb in {1, 2}
        x = x_ref[b]                                                     # (C, HW)

        # tmp[k, key] = (Wc^T Wb x)[k, key] + (Wc^T bb)[k]
        tmp = jnp.dot(m1, x, preferred_element_type=jnp.float32) + wkey  # (C, HW)

        # energy_t[key, query] = sum_k x[k, query] * tmp[k, key]... contracted on
        # dim 0 of both operands -> no materialized (HW, C) transpose input.
        energy_t = jax.lax.dot_general(
            x, tmp, (((0,), (0,)), ((), ())),
            preferred_element_type=jnp.float32)                          # (HW, HW)
        # (indices: axis 0 = key, axis 1 = query)

        # Softmax over the key axis (= axis 0 of energy_t) -> attention transposed.
        m = jnp.max(energy_t, axis=0, keepdims=True)                     # (1, HW)
        p = jnp.exp(energy_t - m)                                        # (HW, HW)
        l = jnp.sum(p, axis=0, keepdims=True)                            # (1, HW)

        # d = alpha * Wd x  (bias handled as a constant add on the output).
        d = jnp.dot(wd, x, preferred_element_type=jnp.float32)           # (C, HW)

        # Plain matmul against the UN-normalized exp (bf16 operands, f32 acc):
        # e_un[c, q] = sum_key d[c, key] * p[key, q]
        e_un = jnp.dot(d.astype(jnp.bfloat16), p.astype(jnp.bfloat16),
                       preferred_element_type=jnp.float32)               # (C, HW)

        # Normalize after the matmul (4 vregs instead of 64), EUP reciprocal.
        e = e_un * pl.reciprocal(l, approx=True)                         # (C, HW)

        # out = alpha*feat_e + alpha*bd + x   (residual)
        o_ref[b] = e + bout + x


def init_params(key):
    ks = jax.random.split(key, 6)
    s = 0.1
    return dict(
        wb=s * jax.random.normal(ks[0], (CR, IN_CH), jnp.float32),
        bb=s * jax.random.normal(ks[1], (CR,), jnp.float32),
        wc=s * jax.random.normal(ks[2], (CR, IN_CH), jnp.float32),
        bc=s * jax.random.normal(ks[3], (CR,), jnp.float32),
        wd=s * jax.random.normal(ks[4], (IN_CH, IN_CH), jnp.float32),
        bd=s * jax.random.normal(ks[5], (IN_CH,), jnp.float32),
        # PyTorch inits alpha to 0.0; use a nonzero value so the kernel path matters.
        alpha=jnp.float32(0.5),
    )


def fold_params(params):
    """Wrapper-side folding (all exact algebra):
       m1   = Wc^T Wb          -> transposed-energy quadratic form
       wkey = Wc^T bb          -> only bias term that survives the softmax
       wd   = alpha * Wd       -> alpha folded into conv_d weight
       bout = alpha * bd       -> conv_d bias (attention rows sum to 1)
       (conv_c bias bc cancels exactly: it only shifts each query row of the
        energy, which the softmax removes.)"""
    m1 = jnp.dot(params["wc"].T, params["wb"])                 # (C, C)
    wkey = jnp.dot(params["wc"].T, params["bb"])[:, None]      # (C, 1)
    wd = params["alpha"] * params["wd"]                        # (C, C)
    bout = (params["alpha"] * params["bd"])[:, None]           # (C, 1)
    return (m1.astype(jnp.float32), wd.astype(jnp.float32),
            wkey.astype(jnp.float32), bout.astype(jnp.float32))


def _tensorcores_per_chip():
    """2 on v7x-style chips (Pallas grid can be split across both TCs), else 1."""
    try:
        kind = jax.devices()[0].device_kind.lower()
    except Exception:
        return 1
    return 2 if ("v7" in kind or "7x" in kind) else 1


@functools.partial(jax.jit, static_argnames=("nb",))
def _pam_forward(x, params, nb):
    B, C, Hh, Ww = x.shape
    hw = Hh * Ww
    xf = x.reshape(B, C, hw).astype(jnp.float32)       # only wrapper pass over x
    m1, wd, wkey, bout = fold_params(params)

    grid_spec = pltpu.PrefetchScalarGridSpec(
        num_scalar_prefetch=0,
        grid=(B // nb,),
        in_specs=[
            pl.BlockSpec((nb, C, hw), lambda n: (n, 0, 0)),   # x, lane-dense
            pl.BlockSpec((C, C), lambda n: (0, 0)),           # Wc^T Wb
            pl.BlockSpec((C, C), lambda n: (0, 0)),           # alpha * Wd
            pl.BlockSpec((C, 1), lambda n: (0, 0)),           # Wc^T bb
            pl.BlockSpec((C, 1), lambda n: (0, 0)),           # alpha * bd
        ],
        out_specs=pl.BlockSpec((nb, C, hw), lambda n: (n, 0, 0)),
    )

    out = pl.pallas_call(
        pam_kernel,
        out_shape=jax.ShapeDtypeStruct((B, C, hw), jnp.float32),
        grid_spec=grid_spec,
        compiler_params=pltpu.CompilerParams(
            dimension_semantics=("parallel",) if nb == 1 else ("arbitrary",)),
    )(xf, m1, wd, wkey, bout)
    return out.reshape(B, C, Hh, Ww)


def position_attention_pallas(x, params):
    # v7x: one batch element per grid step (one per TensorCore).
    # v5e / v6e: single TensorCore -> merge the whole batch into one grid step
    # to avoid per-step pipeline overhead.
    nb = 1 if _tensorcores_per_chip() >= 2 else x.shape[0]
    return _pam_forward(x, params, nb)


def position_attention_reference(x, params):
    """Pure-JAX reference matching the PyTorch forward (NCHW)."""
    B, C_, H_, W_ = x.shape
    hw = H_ * W_

    def conv1x1(v, w, b):
        return jnp.einsum('nchw,oc->nohw', v, w) + b.reshape(1, -1, 1, 1)

    fb = conv1x1(x, params["wb"], params["bb"]).reshape(B, -1, hw)          # (B, Cr, HW)
    fb = jnp.transpose(fb, (0, 2, 1))                                        # (B, HW, Cr)
    fc = conv1x1(x, params["wc"], params["bc"]).reshape(B, -1, hw)           # (B, Cr, HW)
    attn = jax.nn.softmax(jnp.einsum('bik,bkj->bij', fb, fc), axis=-1)       # (B, HW, HW)
    fd = conv1x1(x, params["wd"], params["bd"]).reshape(B, -1, hw)           # (B, C, HW)
    fe = jnp.einsum('bcj,bij->bci', fd, attn).reshape(B, C_, H_, W_)
    return params["alpha"] * fe + x


if __name__ == "__main__":
    key = jax.random.PRNGKey(0)
    kx, kp = jax.random.split(key)
    x = jax.random.normal(kx, (N, IN_CH, H, W), dtype=jnp.float32)
    params = init_params(kp)

    out = jax.block_until_ready(position_attention_pallas(x, params))
    ref = position_attention_reference(x, params)

    assert out.shape == (N, IN_CH, H, W)
    # Tolerance covers the EUP approximate reciprocal and the bf16 attention matmul
    # (attn in [0, 1], f32 accumulation).
    if not jnp.allclose(out, ref, atol=3e-3, rtol=3e-3):
        raise AssertionError(
            "mismatch vs reference, max abs err = %e"
            % float(jnp.max(jnp.abs(out - ref))))
    print("KERNEL_OK")
</pallas_src>

<mosaic_0001>
module attributes {stable_mosaic.version = 11 : i64} {
  func.func @pam_kernel(%arg0: i32, %arg1: memref<2x16x256xf32, #tpu.memory_space<vmem>>, %arg2: memref<16x16xf32, #tpu.memory_space<vmem>>, %arg3: memref<16x16xf32, #tpu.memory_space<vmem>>, %arg4: memref<16x1xf32, #tpu.memory_space<vmem>>, %arg5: memref<16x1xf32, #tpu.memory_space<vmem>>, %arg6: memref<2x16x256xf32, #tpu.memory_space<vmem>>) attributes {dimension_semantics = [#tpu.dimension_semantics<arbitrary>], iteration_bounds = array<i64: 1>, scalar_prefetch = 0 : i64, scratch_operands = 0 : i64, tpu.core_type = #tpu.core_type<tc>, window_params = [{transform_indices = @transform_0, window_bounds = array<i64: 2, 16, 256>}, {pipeline_mode = #tpu.pipeline_mode<synchronous>, transform_indices = @transform_1, window_bounds = array<i64: 16, 16>}, {pipeline_mode = #tpu.pipeline_mode<synchronous>, transform_indices = @transform_2, window_bounds = array<i64: 16, 16>}, {pipeline_mode = #tpu.pipeline_mode<synchronous>, transform_indices = @transform_3, window_bounds = array<i64: 16, 1>}, {pipeline_mode = #tpu.pipeline_mode<synchronous>, transform_indices = @transform_4, window_bounds = array<i64: 16, 1>}, {transform_indices = @transform_5, window_bounds = array<i64: 2, 16, 256>}]} {
    %c0 = arith.constant 0 : index
    %c0_0 = arith.constant 0 : index
    %0 = vector.load %arg2[%c0, %c0_0] : memref<16x16xf32, #tpu.memory_space<vmem>>, vector<16x16xf32>
    %c0_1 = arith.constant 0 : index
    %c0_2 = arith.constant 0 : index
    %1 = vector.load %arg3[%c0_1, %c0_2] : memref<16x16xf32, #tpu.memory_space<vmem>>, vector<16x16xf32>
    %c0_3 = arith.constant 0 : index
    %c0_4 = arith.constant 0 : index
    %2 = vector.load %arg4[%c0_3, %c0_4] : memref<16x1xf32, #tpu.memory_space<vmem>>, vector<16x1xf32>
    %c0_5 = arith.constant 0 : index
    %c0_6 = arith.constant 0 : index
    %3 = vector.load %arg5[%c0_5, %c0_6] : memref<16x1xf32, #tpu.memory_space<vmem>>, vector<16x1xf32>
    %c0_7 = arith.constant 0 : index
    %c0_8 = arith.constant 0 : index
    %c0_9 = arith.constant 0 : index
    %4 = vector.load %arg1[%c0_7, %c0_8, %c0_9] : memref<2x16x256xf32, #tpu.memory_space<vmem>>, vector<1x16x256xf32>
    %5 = vector.shape_cast %4 : vector<1x16x256xf32> to vector<16x256xf32>
    %cst = arith.constant dense<0.000000e+00> : vector<16x256xf32>
    %6 = tpu.matmul %0, %5, %cst {dimension_numbers = #tpu.dot_dimension_numbers<[1], [0], [0], [1], [0, 0, 1, 1], [], []>} : vector<16x16xf32>, vector<16x256xf32>, vector<16x256xf32> -> vector<16x256xf32>
    %7 = vector.broadcast %2 : vector<16x1xf32> to vector<16x256xf32>
    %8 = arith.addf %6, %7 : vector<16x256xf32>
    %cst_10 = arith.constant dense<0.000000e+00> : vector<256x256xf32>
    %9 = tpu.matmul %5, %8, %cst_10 {dimension_numbers = #tpu.dot_dimension_numbers<[0], [0], [1], [1], [0, 1, 1, 1], [], []>} : vector<16x256xf32>, vector<16x256xf32>, vector<256x256xf32> -> vector<256x256xf32>
    %cst_11 = arith.constant dense<0xFF800000> : vector<256xf32>
    %10 = vector.multi_reduction <maximumf>, %9, %cst_11 [0] : vector<256x256xf32> to vector<256xf32>
    %11 = vector.shape_cast %10 : vector<256xf32> to vector<1x256xf32>
    %12 = vector.broadcast %11 : vector<1x256xf32> to vector<256x256xf32>
    %13 = arith.subf %9, %12 : vector<256x256xf32>
    %14 = math.exp %13 : vector<256x256xf32>
    %cst_12 = arith.constant dense<0.000000e+00> : vector<256xf32>
    %15 = vector.multi_reduction <add>, %14, %cst_12 [0] : vector<256x256xf32> to vector<256xf32>
    %16 = vector.shape_cast %15 : vector<256xf32> to vector<1x256xf32>
    %cst_13 = arith.constant dense<0.000000e+00> : vector<16x256xf32>
    %17 = tpu.matmul %1, %5, %cst_13 {dimension_numbers = #tpu.dot_dimension_numbers<[1], [0], [0], [1], [0, 0, 1, 1], [], []>} : vector<16x16xf32>, vector<16x256xf32>, vector<16x256xf32> -> vector<16x256xf32>
    %18 = arith.truncf %17 : vector<16x256xf32> to vector<16x256xbf16>
    %19 = arith.truncf %14 : vector<256x256xf32> to vector<256x256xbf16>
    %cst_14 = arith.constant dense<0.000000e+00> : vector<16x256xf32>
    %20 = tpu.matmul %18, %19, %cst_14 {dimension_numbers = #tpu.dot_dimension_numbers<[1], [0], [0], [1], [0, 0, 1, 1], [], []>} : vector<16x256xbf16>, vector<256x256xbf16>, vector<16x256xf32> -> vector<16x256xf32>
    %21 = tpu.reciprocal %16 {approx = true} : vector<1x256xf32> -> vector<1x256xf32>
    %22 = vector.broadcast %21 : vector<1x256xf32> to vector<16x256xf32>
    %23 = arith.mulf %20, %22 : vector<16x256xf32>
    %24 = vector.broadcast %3 : vector<16x1xf32> to vector<16x256xf32>
    %25 = arith.addf %23, %24 : vector<16x256xf32>
    %26 = arith.addf %25, %5 : vector<16x256xf32>
    %c0_15 = arith.constant 0 : index
    %c0_16 = arith.constant 0 : index
    %c0_17 = arith.constant 0 : index
    %27 = vector.load %arg6[%c0_15, %c0_16, %c0_17] : memref<2x16x256xf32, #tpu.memory_space<vmem>>, vector<1x16x256xf32>
    %28 = vector.shape_cast %27 : vector<1x16x256xf32> to vector<16x256xf32>
    %29 = vector.shape_cast %26 : vector<16x256xf32> to vector<1x16x256xf32>
    tpu.vector_store %arg6[%c0_15, %c0_16, %c0_17], %29 {strides = array<i32>} : memref<2x16x256xf32, #tpu.memory_space<vmem>>, vector<1x16x256xf32>,
    %c1 = arith.constant 1 : index
    %c0_18 = arith.constant 0 : index
    %c0_19 = arith.constant 0 : index
    %30 = vector.load %arg1[%c1, %c0_18, %c0_19] : memref<2x16x256xf32, #tpu.memory_space<vmem>>, vector<1x16x256xf32>
    %31 = vector.shape_cast %30 : vector<1x16x256xf32> to vector<16x256xf32>
    %cst_20 = arith.constant dense<0.000000e+00> : vector<16x256xf32>
    %32 = tpu.matmul %0, %31, %cst_20 {dimension_numbers = #tpu.dot_dimension_numbers<[1], [0], [0], [1], [0, 0, 1, 1], [], []>} : vector<16x16xf32>, vector<16x256xf32>, vector<16x256xf32> -> vector<16x256xf32>
    %33 = vector.broadcast %2 : vector<16x1xf32> to vector<16x256xf32>
    %34 = arith.addf %32, %33 : vector<16x256xf32>
    %cst_21 = arith.constant dense<0.000000e+00> : vector<256x256xf32>
    %35 = tpu.matmul %31, %34, %cst_21 {dimension_numbers = #tpu.dot_dimension_numbers<[0], [0], [1], [1], [0, 1, 1, 1], [], []>} : vector<16x256xf32>, vector<16x256xf32>, vector<256x256xf32> -> vector<256x256xf32>
    %cst_22 = arith.constant dense<0xFF800000> : vector<256xf32>
    %36 = vector.multi_reduction <maximumf>, %35, %cst_22 [0] : vector<256x256xf32> to vector<256xf32>
    %37 = vector.shape_cast %36 : vector<256xf32> to vector<1x256xf32>
    %38 = vector.broadcast %37 : vector<1x256xf32> to vector<256x256xf32>
    %39 = arith.subf %35, %38 : vector<256x256xf32>
    %40 = math.exp %39 : vector<256x256xf32>
    %cst_23 = arith.constant dense<0.000000e+00> : vector<256xf32>
    %41 = vector.multi_reduction <add>, %40, %cst_23 [0] : vector<256x256xf32> to vector<256xf32>
    %42 = vector.shape_cast %41 : vector<256xf32> to vector<1x256xf32>
    %cst_24 = arith.constant dense<0.000000e+00> : vector<16x256xf32>
    %43 = tpu.matmul %1, %31, %cst_24 {dimension_numbers = #tpu.dot_dimension_numbers<[1], [0], [0], [1], [0, 0, 1, 1], [], []>} : vector<16x16xf32>, vector<16x256xf32>, vector<16x256xf32> -> vector<16x256xf32>
    %44 = arith.truncf %43 : vector<16x256xf32> to vector<16x256xbf16>
    %45 = arith.truncf %40 : vector<256x256xf32> to vector<256x256xbf16>
    %cst_25 = arith.constant dense<0.000000e+00> : vector<16x256xf32>
    %46 = tpu.matmul %44, %45, %cst_25 {dimension_numbers = #tpu.dot_dimension_numbers<[1], [0], [0], [1], [0, 0, 1, 1], [], []>} : vector<16x256xbf16>, vector<256x256xbf16>, vector<16x256xf32> -> vector<16x256xf32>
    %47 = tpu.reciprocal %42 {approx = true} : vector<1x256xf32> -> vector<1x256xf32>
    %48 = vector.broadcast %47 : vector<1x256xf32> to vector<16x256xf32>
    %49 = arith.mulf %46, %48 : vector<16x256xf32>
    %50 = vector.broadcast %3 : vector<16x1xf32> to vector<16x256xf32>
    %51 = arith.addf %49, %50 : vector<16x256xf32>
    %52 = arith.addf %51, %31 : vector<16x256xf32>
    %c1_26 = arith.constant 1 : index
    %c0_27 = arith.constant 0 : index
    %c0_28 = arith.constant 0 : index
    %53 = vector.load %arg6[%c1_26, %c0_27, %c0_28] : memref<2x16x256xf32, #tpu.memory_space<vmem>>, vector<1x16x256xf32>
    %54 = vector.shape_cast %53 : vector<1x16x256xf32> to vector<16x256xf32>
    %55 = vector.shape_cast %52 : vector<16x256xf32> to vector<1x16x256xf32>
    tpu.vector_store %arg6[%c1_26, %c0_27, %c0_28], %55 {strides = array<i32>} : memref<2x16x256xf32, #tpu.memory_space<vmem>>, vector<1x16x256xf32>,
    return
  }
  func.func @transform_0(%arg0: i32) -> (i32, i32, i32) {
    %c0_i32 = arith.constant 0 : i32
    %c0_i32_0 = arith.constant 0 : i32
    %c0_i32_1 = arith.constant 0 : i32
    return %arg0, %c0_i32, %c0_i32_0 : i32, i32, i32
  }
  func.func @transform_1(%arg0: i32) -> (i32, i32) {
    %c0_i32 = arith.constant 0 : i32
    %c0_i32_0 = arith.constant 0 : i32
    %c0_i32_1 = arith.constant 0 : i32
    return %c0_i32, %c0_i32_0 : i32, i32
  }
  func.func @transform_2(%arg0: i32) -> (i32, i32) {
    %c0_i32 = arith.constant 0 : i32
    %c0_i32_0 = arith.constant 0 : i32
    %c0_i32_1 = arith.constant 0 : i32
    return %c0_i32, %c0_i32_0 : i32, i32
  }
  func.func @transform_3(%arg0: i32) -> (i32, i32) {
    %c0_i32 = arith.constant 0 : i32
    %c0_i32_0 = arith.constant 0 : i32
    %c0_i32_1 = arith.constant 0 : i32
    return %c0_i32, %c0_i32_0 : i32, i32
  }
  func.func @transform_4(%arg0: i32) -> (i32, i32) {
    %c0_i32 = arith.constant 0 : i32
    %c0_i32_0 = arith.constant 0 : i32
    %c0_i32_1 = arith.constant 0 : i32
    return %c0_i32, %c0_i32_0 : i32, i32
  }
  func.func @transform_5(%arg0: i32) -> (i32, i32, i32) {
    %c0_i32 = arith.constant 0 : i32
    %c0_i32_0 = arith.constant 0 : i32
    %c0_i32_1 = arith.constant 0 : i32
    return %arg0, %c0_i32, %c0_i32_0 : i32, i32, i32
  }
}

</mosaic_0001>

<llo_original>
// kernel: _pam_forward.1
$region0: #{_pam_forward.1}
  #allocation0 [shape = 'u32[]', space=smem, size = 0x4, offset = 0x4, fixed_abs, tag = 'smem constant byte address 0x4 - core index']
  #allocation1 [shape = 'u32[72,128]{1,0:T(1,128)}', space=vmem, size = 0x9000, scoped, tag = 'internal scratch']
  %s0 = inlined_call_operand.vmem [shape: f32[2,16,256], index: 0, kind: input, shape index: {}]
  %s1 = inlined_call_operand.vmem [shape: f32[16,16], index: 1, kind: input, shape index: {}]
  %s2 = inlined_call_operand.vmem [shape: f32[16,16], index: 2, kind: input, shape index: {}]
  %s3 = inlined_call_operand.vmem [shape: f32[16,1], index: 3, kind: input, shape index: {}]
  %s4 = inlined_call_operand.vmem [shape: f32[16,1], index: 4, kind: input, shape index: {}]
  %s5 = inlined_call_operand.vmem [shape: f32[2,16,256], index: 5, kind: output, shape index: {}]
  %s6 = sld [smem:[#allocation0]]
  $region30: #{_pam_forward.1} parent=0
    _
  %s8 = ssub.s32 1, %s6
  %s9 = scalar_select 0, %s8, %s6
  // Predicated region
  $region2: #{_pam_forward.1} parent=0 // pred_check
    _
  $region3: #{_pam_forward.1} parent=0 // pred_check_branch
    %11 = sbr.rel (0) target = $region5
  $region4: #{_pam_forward.1} parent=0 // pred_region
    _
  $region5: #{_pam_forward.1} parent=0 // pred_fallthru
    _
  // Predicated region
  $region6: #{_pam_forward.1} parent=0 // pred_check
    _
  $region7: #{_pam_forward.1} parent=0 // pred_check_branch
    %13 = sbr.rel (0) target = $region9
  $region8: #{_pam_forward.1} parent=0 // pred_region
    _
  $region9: #{_pam_forward.1} parent=0 // pred_fallthru
    _
  // Predicated region
  $region10: #{_pam_forward.1} parent=0 // pred_check
    _
  $region11: #{_pam_forward.1} parent=0 // pred_check_branch
    %15 = sbr.rel (0) target = $region13
  $region12: #{_pam_forward.1} parent=0 // pred_region
    _
  $region13: #{_pam_forward.1} parent=0 // pred_fallthru
    _
  // Predicated region
  $region14: #{_pam_forward.1} parent=0 // pred_check
    _
  $region15: #{_pam_forward.1} parent=0 // pred_check_branch
    %17 = sbr.rel (0) target = $region17
  $region16: #{_pam_forward.1} parent=0 // pred_region
    _
  $region17: #{_pam_forward.1} parent=0 // pred_fallthru
    _
  // Predicated region
  $region18: #{_pam_forward.1} parent=0 // pred_check
    _
  $region19: #{_pam_forward.1} parent=0 // pred_check_branch
    %19 = sbr.rel (0) target = $region21
  $region20: #{_pam_forward.1} parent=0 // pred_region
    _
  $region21: #{_pam_forward.1} parent=0 // pred_fallthru
    _
  %v20 = vld [vmem:[%s1] sm:$0xff]
  %v21 = vld [vmem:[%s1 + $0x8] sm:$0xff]
  %v22 = vld [vmem:[%s2] sm:$0xff]
  %v23 = vld [vmem:[%s2 + $0x8] sm:$0xff]
  %v24 = vld [vmem:[%s3] sm:$0xff]
  %v25 = vld [vmem:[%s3 + $0x8] sm:$0xff]
  %v26 = vld [vmem:[%s4] sm:$0xff]
  %v27 = vld [vmem:[%s4 + $0x8] sm:$0xff]
  %v28 = vld [vmem:[%s0] sm:$0xff]
  %v29 = vld [vmem:[%s0 + $0x8] sm:$0xff]
  %v30 = vld [vmem:[%s0 + $0x10] sm:$0xff]
  %v31 = vld [vmem:[%s0 + $0x18] sm:$0xff]
  %33 = vset.pattern.permute.xlu0 0
  %34 = vperm.xlu0 %33, %v24
  %v35 = vpop.permute.xlu0 %34
  %38 = vset.pattern.permute.xlu0 0
  %39 = vperm.xlu0 %38, %v25
  %v40 = vpop.permute.xlu0 %39
  %vm42 = vcmask 130048
  %v44 = vsel %vm42, %v20, 0
  %v47 = vsel %vm42, %v21, 0
  %49 = vmatpush.msra.mxu0 0.0
  %50 = vmatpush.msra.mxu0 0.0
  %51 = vmatpush.msra.mxu0 0.0
  %52 = vmatpush.msra.mxu0 0.0
  %53 = vmatpush.msra.mxu0 0.0
  %54 = vmatpush.msra.mxu0 0.0
  %55 = vmatpush.msra.mxu0 0.0
  %56 = vmatpush.msra.mxu0 0.0
  %57 = vmatpush.msra.mxu0 0.0
  %58 = vmatpush.msra.mxu0 0.0
  %59 = vmatpush.msra.mxu0 0.0
  %60 = vmatpush.msra.mxu0 0.0
  %61 = vmatpush.msra.mxu0 0.0
  %62 = vmatpush.msra.mxu0 0.0
  %63 = vmatpush.msra.mxu0 %v30
  %64 = vmatpush.msra.mxu0 %v28
  %65 = vmatmul.f32.gmra.mxu0 %v44
  %v66 = vpop.f32.mrf.mxu0
  %v67 = vadd.f32 %v35, %v66
  %68 = vmatmul.f32.gmra.mxu0 %v47
  %v69 = vpop.f32.mrf.mxu0
  %v70 = vadd.f32 %v40, %v69
  %71 = vdwg.mxu0
  %72 = vmatpush.msra.mxu0 0.0
  %73 = vmatpush.msra.mxu0 0.0
  %74 = vmatpush.msra.mxu0 0.0
  %75 = vmatpush.msra.mxu0 0.0
  %76 = vmatpush.msra.mxu0 0.0
  %77 = vmatpush.msra.mxu0 0.0
  %78 = vmatpush.msra.mxu0 0.0
  %79 = vmatpush.msra.mxu0 0.0
  %80 = vmatpush.msra.mxu0 0.0
  %81 = vmatpush.msra.mxu0 0.0
  %82 = vmatpush.msra.mxu0 0.0
  %83 = vmatpush.msra.mxu0 0.0
  %84 = vmatpush.msra.mxu0 0.0
  %85 = vmatpush.msra.mxu0 0.0
  %86 = vmatpush.msra.mxu0 %v31
  %87 = vmatpush.msra.mxu0 %v29
  %88 = vmatmul.f32.gmra.mxu0 %v44
  %v89 = vpop.f32.mrf.mxu0
  %v90 = vadd.f32 %v35, %v89
  %91 = vmatmul.f32.gmra.mxu0 %v47
  %v92 = vpop.f32.mrf.mxu0
  %v93 = vadd.f32 %v40, %v92
  %94 = vdwg.mxu0
  %95 = vxpose.xlu0.b32.start [1/16] %v28, 128
  %96 = vxpose.xlu0.b32.cont [2/16] %v30, 128
  %97 = vxpose.xlu0.b32.cont [3/16] 0.0, 128
  %98 = vxpose.xlu0.b32.cont [4/16] 0.0, 128
  %99 = vxpose.xlu0.b32.cont [5/16] 0.0, 128
  %100 = vxpose.xlu0.b32.cont [6/16] 0.0, 128
  %101 = vxpose.xlu0.b32.cont [7/16] 0.0, 128
  %102 = vxpose.xlu0.b32.cont [8/16] 0.0, 128
  %103 = vxpose.xlu0.b32.cont [9/16] 0.0, 128
  %104 = vxpose.xlu0.b32.cont [10/16] 0.0, 128
  %105 = vxpose.xlu0.b32.cont [11/16] 0.0, 128
  %106 = vxpose.xlu0.b32.cont [12/16] 0.0, 128
  %107 = vxpose.xlu0.b32.cont [13/16] 0.0, 128
  %108 = vxpose.xlu0.b32.cont [14/16] 0.0, 128
  %109 = vxpose.xlu0.b32.cont [15/16] 0.0, 128
  %110 = vxpose.xlu0.b32.end [16/16] 0.0, 128
  %v111 = vpop.trf.xlu0
  %v112 = vpop.trf.xlu0
  %v113 = vpop.trf.xlu0
  %v114 = vpop.trf.xlu0
  %v115 = vpop.trf.xlu0
  %v116 = vpop.trf.xlu0
  %v117 = vpop.trf.xlu0
  %v118 = vpop.trf.xlu0
  %v119 = vpop.trf.xlu0
  %v120 = vpop.trf.xlu0
  %v121 = vpop.trf.xlu0
  %v122 = vpop.trf.xlu0
  %v123 = vpop.trf.xlu0
  %v124 = vpop.trf.xlu0
  %v125 = vpop.trf.xlu0
  %v126 = vpop.trf.xlu0
  %127 = vxpose.xlu0.b32.start [1/16] %v29, 128
  %128 = vxpose.xlu0.b32.cont [2/16] %v31, 128
  %129 = vxpose.xlu0.b32.cont [3/16] 0.0, 128
  %130 = vxpose.xlu0.b32.cont [4/16] 0.0, 128
  %131 = vxpose.xlu0.b32.cont [5/16] 0.0, 128
  %132 = vxpose.xlu0.b32.cont [6/16] 0.0, 128
  %133 = vxpose.xlu0.b32.cont [7/16] 0.0, 128
  %134 = vxpose.xlu0.b32.cont [8/16] 0.0, 128
  %135 = vxpose.xlu0.b32.cont [9/16] 0.0, 128
  %136 = vxpose.xlu0.b32.cont [10/16] 0.0, 128
  %137 = vxpose.xlu0.b32.cont [11/16] 0.0, 128
  %138 = vxpose.xlu0.b32.cont [12/16] 0.0, 128
  %139 = vxpose.xlu0.b32.cont [13/16] 0.0, 128
  %140 = vxpose.xlu0.b32.cont [14/16] 0.0, 128
  %141 = vxpose.xlu0.b32.cont [15/16] 0.0, 128
  %142 = vxpose.xlu0.b32.end [16/16] 0.0, 128
  %v143 = vpop.trf.xlu0
  %v144 = vpop.trf.xlu0
  %v145 = vpop.trf.xlu0
  %v146 = vpop.trf.xlu0
  %v147 = vpop.trf.xlu0
  %v148 = vpop.trf.xlu0
  %v149 = vpop.trf.xlu0
  %v150 = vpop.trf.xlu0
  %v151 = vpop.trf.xlu0
  %v152 = vpop.trf.xlu0
  %v153 = vpop.trf.xlu0
  %v154 = vpop.trf.xlu0
  %v155 = vpop.trf.xlu0
  %v156 = vpop.trf.xlu0
  %v157 = vpop.trf.xlu0
  %v158 = vpop.trf.xlu0
  %v160 = vsel %vm42, %v111, 0
  %v163 = vsel %vm42, %v112, 0
  %v166 = vsel %vm42, %v113, 0
  %v169 = vsel %vm42, %v114, 0
  %v172 = vsel %vm42, %v115, 0
  %v175 = vsel %vm42, %v116, 0
  %v178 = vsel %vm42, %v117, 0
  %v181 = vsel %vm42, %v118, 0
  %v184 = vsel %vm42, %v119, 0
  %v187 = vsel %vm42, %v120, 0
  %v190 = vsel %vm42, %v121, 0
  %v193 = vsel %vm42, %v122, 0
  %v196 = vsel %vm42, %v123, 0
  %v199 = vsel %vm42, %v124, 0
  %v202 = vsel %vm42, %v125, 0
  %v205 = vsel %vm42, %v126, 0
  %v208 = vsel %vm42, %v143, 0
  %v211 = vsel %vm42, %v144, 0
  %v214 = vsel %vm42, %v145, 0
  %v217 = vsel %vm42, %v146, 0
  %v220 = vsel %vm42, %v147, 0
  %v223 = vsel %vm42, %v148, 0
  %v226 = vsel %vm42, %v149, 0
  %v229 = vsel %vm42, %v150, 0
  %v232 = vsel %vm42, %v151, 0
  %v235 = vsel %vm42, %v152, 0
  %v238 = vsel %vm42, %v153, 0
  %v241 = vsel %vm42, %v154, 0
  %v244 = vsel %vm42, %v155, 0
  %v247 = vsel %vm42, %v156, 0
  %v250 = vsel %vm42, %v157, 0
  %v253 = vsel %vm42, %v158, 0
  %255 = vmatpush.msra.mxu0 0.0
  %256 = vmatpush.msra.mxu0 0.0
  %257 = vmatpush.msra.mxu0 0.0
  %258 = vmatpush.msra.mxu0 0.0
  %259 = vmatpush.msra.mxu0 0.0
  %260 = vmatpush.msra.mxu0 0.0
  %261 = vmatpush.msra.mxu0 0.0
  %262 = vmatpush.msra.mxu0 0.0
  %263 = vmatpush.msra.mxu0 0.0
  %264 = vmatpush.msra.mxu0 0.0
  %265 = vmatpush.msra.mxu0 0.0
  %266 = vmatpush.msra.mxu0 0.0
  %267 = vmatpush.msra.mxu0 0.0
  %268 = vmatpush.msra.mxu0 0.0
  %269 = vmatpush.msra.mxu0 %v70
  %270 = vmatpush.msra.mxu0 %v67
  %271 = vmatmul.f32.gmra.mxu0 %v160
  %v272 = vpop.f32.mrf.mxu0
  %v273 = vadd.f32 0.0, %v272
  %274 = vmatmul.f32.gmra.mxu0 %v163
  %v275 = vpop.f32.mrf.mxu0
  %v276 = vadd.f32 0.0, %v275
  %277 = vmatmul.f32.gmra.mxu0 %v166
  %v278 = vpop.f32.mrf.mxu0
  %v279 = vadd.f32 0.0, %v278
  %280 = vmatmul.f32.gmra.mxu0 %v169
  %v281 = vpop.f32.mrf.mxu0
  %v282 = vadd.f32 0.0, %v281
  %283 = vmatmul.f32.gmra.mxu0 %v172
  %v284 = vpop.f32.mrf.mxu0
  %v285 = vadd.f32 0.0, %v284
  %286 = vmatmul.f32.gmra.mxu0 %v175
  %v287 = vpop.f32.mrf.mxu0
  %v288 = vadd.f32 0.0, %v287
  %289 = vmatmul.f32.gmra.mxu0 %v178
  %v290 = vpop.f32.mrf.mxu0
  %v291 = vadd.f32 0.0, %v290
  %292 = vmatmul.f32.gmra.mxu0 %v181
  %v293 = vpop.f32.mrf.mxu0
  %v294 = vadd.f32 0.0, %v293
  %295 = vmatmul.f32.gmra.mxu0 %v184
  %v296 = vpop.f32.mrf.mxu0
  %v297 = vadd.f32 0.0, %v296
  %298 = vmatmul.f32.gmra.mxu0 %v187
  %v299 = vpop.f32.mrf.mxu0
  %v300 = vadd.f32 0.0, %v299
  %301 = vmatmul.f32.gmra.mxu0 %v190
  %v302 = vpop.f32.mrf.mxu0
  %v303 = vadd.f32 0.0, %v302
  %304 = vmatmul.f32.gmra.mxu0 %v193
  %v305 = vpop.f32.mrf.mxu0
  %v306 = vadd.f32 0.0, %v305
  %307 = vmatmul.f32.gmra.mxu0 %v196
  %v308 = vpop.f32.mrf.mxu0
  %v309 = vadd.f32 0.0, %v308
  %310 = vmatmul.f32.gmra.mxu0 %v199
  %v311 = vpop.f32.mrf.mxu0
  %v312 = vadd.f32 0.0, %v311
  %313 = vmatmul.f32.gmra.mxu0 %v202
  %v314 = vpop.f32.mrf.mxu0
  %v315 = vadd.f32 0.0, %v314
  %316 = vmatmul.f32.gmra.mxu0 %v205
  %v317 = vpop.f32.mrf.mxu0
  %v318 = vadd.f32 0.0, %v317
  %319 = vmatmul.f32.gmra.mxu0 %v208
  %v320 = vpop.f32.mrf.mxu0
  %v321 = vadd.f32 0.0, %v320
  %322 = vmatmul.f32.gmra.mxu0 %v211
  %v323 = vpop.f32.mrf.mxu0
  %v324 = vadd.f32 0.0, %v323
  %325 = vmatmul.f32.gmra.mxu0 %v214
  %v326 = vpop.f32.mrf.mxu0
  %v327 = vadd.f32 0.0, %v326
  %328 = vmatmul.f32.gmra.mxu0 %v217
  %v329 = vpop.f32.mrf.mxu0
  %v330 = vadd.f32 0.0, %v329
  %331 = vmatmul.f32.gmra.mxu0 %v220
  %v332 = vpop.f32.mrf.mxu0
  %v333 = vadd.f32 0.0, %v332
  %334 = vmatmul.f32.gmra.mxu0 %v223
  %v335 = vpop.f32.mrf.mxu0
  %v336 = vadd.f32 0.0, %v335
  %337 = vmatmul.f32.gmra.mxu0 %v226
  %v338 = vpop.f32.mrf.mxu0
  %v339 = vadd.f32 0.0, %v338
  %340 = vmatmul.f32.gmra.mxu0 %v229
  %v341 = vpop.f32.mrf.mxu0
  %v342 = vadd.f32 0.0, %v341
  %343 = vmatmul.f32.gmra.mxu0 %v232
  %v344 = vpop.f32.mrf.mxu0
  %v345 = vadd.f32 0.0, %v344
  %346 = vmatmul.f32.gmra.mxu0 %v235
  %v347 = vpop.f32.mrf.mxu0
  %v348 = vadd.f32 0.0, %v347
  %349 = vmatmul.f32.gmra.mxu0 %v238
  %v350 = vpop.f32.mrf.mxu0
  %v351 = vadd.f32 0.0, %v350
  %352 = vmatmul.f32.gmra.mxu0 %v241
  %v353 = vpop.f32.mrf.mxu0
  %v354 = vadd.f32 0.0, %v353
  %355 = vmatmul.f32.gmra.mxu0 %v244
  %v356 = vpop.f32.mrf.mxu0
  %v357 = vadd.f32 0.0, %v356
  %358 = vmatmul.f32.gmra.mxu0 %v247
  %v359 = vpop.f32.mrf.mxu0
  %v360 = vadd.f32 0.0, %v359
  %361 = vmatmul.f32.gmra.mxu0 %v250
  %v362 = vpop.f32.mrf.mxu0
  %v363 = vadd.f32 0.0, %v362
  %364 = vmatmul.f32.gmra.mxu0 %v253
  %v365 = vpop.f32.mrf.mxu0
  %v366 = vadd.f32 0.0, %v365
  %367 = vdwg.mxu0
  %368 = vmatpush.msra.mxu0 0.0
  %369 = vmatpush.msra.mxu0 0.0
  %370 = vmatpush.msra.mxu0 0.0
  %371 = vmatpush.msra.mxu0 0.0
  %372 = vmatpush.msra.mxu0 0.0
  %373 = vmatpush.msra.mxu0 0.0
  %374 = vmatpush.msra.mxu0 0.0
  %375 = vmatpush.msra.mxu0 0.0
  %376 = vmatpush.msra.mxu0 0.0
  %377 = vmatpush.msra.mxu0 0.0
  %378 = vmatpush.msra.mxu0 0.0
  %379 = vmatpush.msra.mxu0 0.0
  %380 = vmatpush.msra.mxu0 0.0
  %381 = vmatpush.msra.mxu0 0.0
  %382 = vmatpush.msra.mxu0 %v93
  %383 = vmatpush.msra.mxu0 %v90
  %384 = vmatmul.f32.gmra.mxu0 %v160
  %v385 = vpop.f32.mrf.mxu0
  %v386 = vadd.f32 0.0, %v385
  %387 = vmatmul.f32.gmra.mxu0 %v163
  %v388 = vpop.f32.mrf.mxu0
  %v389 = vadd.f32 0.0, %v388
  %390 = vmatmul.f32.gmra.mxu0 %v166
  %v391 = vpop.f32.mrf.mxu0
  %v392 = vadd.f32 0.0, %v391
  %393 = vmatmul.f32.gmra.mxu0 %v169
  %v394 = vpop.f32.mrf.mxu0
  %v395 = vadd.f32 0.0, %v394
  %396 = vmatmul.f32.gmra.mxu0 %v172
  %v397 = vpop.f32.mrf.mxu0
  %v398 = vadd.f32 0.0, %v397
  %399 = vmatmul.f32.gmra.mxu0 %v175
  %v400 = vpop.f32.mrf.mxu0
  %v401 = vadd.f32 0.0, %v400
  %402 = vmatmul.f32.gmra.mxu0 %v178
  %v403 = vpop.f32.mrf.mxu0
  %v404 = vadd.f32 0.0, %v403
  %405 = vmatmul.f32.gmra.mxu0 %v181
  %v406 = vpop.f32.mrf.mxu0
  %v407 = vadd.f32 0.0, %v406
  %408 = vmatmul.f32.gmra.mxu0 %v184
  %v409 = vpop.f32.mrf.mxu0
  %v410 = vadd.f32 0.0, %v409
  %411 = vmatmul.f32.gmra.mxu0 %v187
  %v412 = vpop.f32.mrf.mxu0
  %v413 = vadd.f32 0.0, %v412
  %414 = vmatmul.f32.gmra.mxu0 %v190
  %v415 = vpop.f32.mrf.mxu0
  %v416 = vadd.f32 0.0, %v415
  %417 = vmatmul.f32.gmra.mxu0 %v193
  %v418 = vpop.f32.mrf.mxu0
  %v419 = vadd.f32 0.0, %v418
  %420 = vmatmul.f32.gmra.mxu0 %v196
  %v421 = vpop.f32.mrf.mxu0
  %v422 = vadd.f32 0.0, %v421
  %423 = vmatmul.f32.gmra.mxu0 %v199
  %v424 = vpop.f32.mrf.mxu0
  %v425 = vadd.f32 0.0, %v424
  %426 = vmatmul.f32.gmra.mxu0 %v202
  %v427 = vpop.f32.mrf.mxu0
  %v428 = vadd.f32 0.0, %v427
  %429 = vmatmul.f32.gmra.mxu0 %v205
  %v430 = vpop.f32.mrf.mxu0
  %v431 = vadd.f32 0.0, %v430
  %432 = vmatmul.f32.gmra.mxu0 %v208
  %v433 = vpop.f32.mrf.mxu0
  %v434 = vadd.f32 0.0, %v433
  %435 = vmatmul.f32.gmra.mxu0 %v211
  %v436 = vpop.f32.mrf.mxu0
  %v437 = vadd.f32 0.0, %v436
  %438 = vmatmul.f32.gmra.mxu0 %v214
  %v439 = vpop.f32.mrf.mxu0
  %v440 = vadd.f32 0.0, %v439
  %441 = vmatmul.f32.gmra.mxu0 %v217
  %v442 = vpop.f32.mrf.mxu0
  %v443 = vadd.f32 0.0, %v442
  %444 = vmatmul.f32.gmra.mxu0 %v220
  %v445 = vpop.f32.mrf.mxu0
  %v446 = vadd.f32 0.0, %v445
  %447 = vmatmul.f32.gmra.mxu0 %v223
  %v448 = vpop.f32.mrf.mxu0
  %v449 = vadd.f32 0.0, %v448
  %450 = vmatmul.f32.gmra.mxu0 %v226
  %v451 = vpop.f32.mrf.mxu0
  %v452 = vadd.f32 0.0, %v451
  %453 = vmatmul.f32.gmra.mxu0 %v229
  %v454 = vpop.f32.mrf.mxu0
  %v455 = vadd.f32 0.0, %v454
  %456 = vmatmul.f32.gmra.mxu0 %v232
  %v457 = vpop.f32.mrf.mxu0
  %v458 = vadd.f32 0.0, %v457
  %459 = vmatmul.f32.gmra.mxu0 %v235
  %v460 = vpop.f32.mrf.mxu0
  %v461 = vadd.f32 0.0, %v460
  %462 = vmatmul.f32.gmra.mxu0 %v238
  %v463 = vpop.f32.mrf.mxu0
  %v464 = vadd.f32 0.0, %v463
  %465 = vmatmul.f32.gmra.mxu0 %v241
  %v466 = vpop.f32.mrf.mxu0
  %v467 = vadd.f32 0.0, %v466
  %468 = vmatmul.f32.gmra.mxu0 %v244
  %v469 = vpop.f32.mrf.mxu0
  %v470 = vadd.f32 0.0, %v469
  %471 = vmatmul.f32.gmra.mxu0 %v247
  %v472 = vpop.f32.mrf.mxu0
  %v473 = vadd.f32 0.0, %v472
  %474 = vmatmul.f32.gmra.mxu0 %v250
  %v475 = vpop.f32.mrf.mxu0
  %v476 = vadd.f32 0.0, %v475
  %477 = vmatmul.f32.gmra.mxu0 %v253
  %v478 = vpop.f32.mrf.mxu0
  %v479 = vadd.f32 0.0, %v478
  %480 = vdwg.mxu0
  %v481 = vmax.f32 %v273, %v279
  %v482 = vmax.f32 %v276, %v282
  %v483 = vmax.f32 %v481, %v285
  %v484 = vmax.f32 %v482, %v288
  %v485 = vmax.f32 %v483, %v291
  %v486 = vmax.f32 %v484, %v294
  %v487 = vmax.f32 %v485, %v297
  %v488 = vmax.f32 %v486, %v300
  %v489 = vmax.f32 %v487, %v303
  %v490 = vmax.f32 %v488, %v306
  %v491 = vmax.f32 %v489, %v309
  %v492 = vmax.f32 %v490, %v312
  %v493 = vmax.f32 %v491, %v315
  %v494 = vmax.f32 %v492, %v318
  %v495 = vmax.f32 %v493, %v321
  %v496 = vmax.f32 %v494, %v324
  %v497 = vmax.f32 %v495, %v327
  %v498 = vmax.f32 %v496, %v330
  %v499 = vmax.f32 %v497, %v333
  %v500 = vmax.f32 %v498, %v336
  %v501 = vmax.f32 %v499, %v339
  %v502 = vmax.f32 %v500, %v342
  %v503 = vmax.f32 %v501, %v345
  %v504 = vmax.f32 %v502, %v348
  %v505 = vmax.f32 %v503, %v351
  %v506 = vmax.f32 %v504, %v354
  %v507 = vmax.f32 %v505, %v357
  %v508 = vmax.f32 %v506, %v360
  %v509 = vmax.f32 %v507, %v363
  %v510 = vmax.f32 %v508, %v366
  %v511 = vmax.f32 %v509, %v510
  %v512 = vrot.slane %v511, 4
  %v513 = vmax.f32 %v511, %v512
  %v514 = vrot.slane %v513, 2
  %v515 = vmax.f32 %v513, %v514
  %v516 = vrot.slane %v515, 1
  %v517 = vmax.f32 %v515, %v516
  %v518 = vmax.f32 %v386, %v392
  %v519 = vmax.f32 %v389, %v395
  %v520 = vmax.f32 %v518, %v398
  %v521 = vmax.f32 %v519, %v401
  %v522 = vmax.f32 %v520, %v404
  %v523 = vmax.f32 %v521, %v407
  %v524 = vmax.f32 %v522, %v410
  %v525 = vmax.f32 %v523, %v413
  %v526 = vmax.f32 %v524, %v416
  %v527 = vmax.f32 %v525, %v419
  %v528 = vmax.f32 %v526, %v422
  %v529 = vmax.f32 %v527, %v425
  %v530 = vmax.f32 %v528, %v428
  %v531 = vmax.f32 %v529, %v431
  %v532 = vmax.f32 %v530, %v434
  %v533 = vmax.f32 %v531, %v437
  %v534 = vmax.f32 %v532, %v440
  %v535 = vmax.f32 %v533, %v443
  %v536 = vmax.f32 %v534, %v446
  %v537 = vmax.f32 %v535, %v449
  %v538 = vmax.f32 %v536, %v452
  %v539 = vmax.f32 %v537, %v455
  %v540 = vmax.f32 %v538, %v458
  %v541 = vmax.f32 %v539, %v461
  %v542 = vmax.f32 %v540, %v464
  %v543 = vmax.f32 %v541, %v467
  %v544 = vmax.f32 %v542, %v470
  %v545 = vmax.f32 %v543, %v473
  %v546 = vmax.f32 %v544, %v476
  %v547 = vmax.f32 %v545, %v479
  %v548 = vmax.f32 %v546, %v547
  %v549 = vrot.slane %v548, 4
  %v550 = vmax.f32 %v548, %v549
  %v551 = vrot.slane %v550, 2
  %v552 = vmax.f32 %v550, %v551
  %v553 = vrot.slane %v552, 1
  %v554 = vmax.f32 %v552, %v553
  %v555 = vsub.f32 %v273, %v517
  %v556 = vsub.f32 %v386, %v554
  %v557 = vsub.f32 %v276, %v517
  %v558 = vsub.f32 %v389, %v554
  %v559 = vsub.f32 %v279, %v517
  %v560 = vsub.f32 %v392, %v554
  %v561 = vsub.f32 %v282, %v517
  %v562 = vsub.f32 %v395, %v554
  %v563 = vsub.f32 %v285, %v517
  %v564 = vsub.f32 %v398, %v554
  %v565 = vsub.f32 %v288, %v517
  %v566 = vsub.f32 %v401, %v554
  %v567 = vsub.f32 %v291, %v517
  %v568 = vsub.f32 %v404, %v554
  %v569 = vsub.f32 %v294, %v517
  %v570 = vsub.f32 %v407, %v554
  %v571 = vsub.f32 %v297, %v517
  %v572 = vsub.f32 %v410, %v554
  %v573 = vsub.f32 %v300, %v517
  %v574 = vsub.f32 %v413, %v554
  %v575 = vsub.f32 %v303, %v517
  %v576 = vsub.f32 %v416, %v554
  %v577 = vsub.f32 %v306, %v517
  %v578 = vsub.f32 %v419, %v554
  %v579 = vsub.f32 %v309, %v517
  %v580 = vsub.f32 %v422, %v554
  %v581 = vsub.f32 %v312, %v517
  %v582 = vsub.f32 %v425, %v554
  %v583 = vsub.f32 %v315, %v517
  %v584 = vsub.f32 %v428, %v554
  %v585 = vsub.f32 %v318, %v517
  %v586 = vsub.f32 %v431, %v554
  %v587 = vsub.f32 %v321, %v517
  %v588 = vsub.f32 %v434, %v554
  %v589 = vsub.f32 %v324, %v517
  %v590 = vsub.f32 %v437, %v554
  %v591 = vsub.f32 %v327, %v517
  %v592 = vsub.f32 %v440, %v554
  %v593 = vsub.f32 %v330, %v517
  %v594 = vsub.f32 %v443, %v554
  %v595 = vsub.f32 %v333, %v517
  %v596 = vsub.f32 %v446, %v554
  %v597 = vsub.f32 %v336, %v517
  %v598 = vsub.f32 %v449, %v554
  %v599 = vsub.f32 %v339, %v517
  %v600 = vsub.f32 %v452, %v554
  %v601 = vsub.f32 %v342, %v517
  %v602 = vsub.f32 %v455, %v554
  %v603 = vsub.f32 %v345, %v517
  %v604 = vsub.f32 %v458, %v554
  %v605 = vsub.f32 %v348, %v517
  %v606 = vsub.f32 %v461, %v554
  %v607 = vsub.f32 %v351, %v517
  %v608 = vsub.f32 %v464, %v554
  %v609 = vsub.f32 %v354, %v517
  %v610 = vsub.f32 %v467, %v554
  %v611 = vsub.f32 %v357, %v517
  %v612 = vsub.f32 %v470, %v554
  %v613 = vsub.f32 %v360, %v517
  %v614 = vsub.f32 %v473, %v554
  %v615 = vsub.f32 %v363, %v517
  %v616 = vsub.f32 %v476, %v554
  %v617 = vsub.f32 %v366, %v517
  %v618 = vsub.f32 %v479, %v554
  %v619 = vmul.f32 %v555, 1.442695
  %v620 = vpow.pop %v619
  %v621 = vmul.f32 %v556, 1.442695
  %v622 = vpow.pop %v621
  %v623 = vmul.f32 %v557, 1.442695
  %v624 = vpow.pop %v623
  %v625 = vmul.f32 %v558, 1.442695
  %v626 = vpow.pop %v625
  %v627 = vmul.f32 %v559, 1.442695
  %v628 = vpow.pop %v627
  %v629 = vmul.f32 %v560, 1.442695
  %v630 = vpow.pop %v629
  %v631 = vmul.f32 %v561, 1.442695
  %v632 = vpow.pop %v631
  %v633 = vmul.f32 %v562, 1.442695
  %v634 = vpow.pop %v633
  %v635 = vmul.f32 %v563, 1.442695
  %v636 = vpow.pop %v635
  %v637 = vmul.f32 %v564, 1.442695
  %v638 = vpow.pop %v637
  %v639 = vmul.f32 %v565, 1.442695
  %v640 = vpow.pop %v639
  %v641 = vmul.f32 %v566, 1.442695
  %v642 = vpow.pop %v641
  %v643 = vmul.f32 %v567, 1.442695
  %v644 = vpow.pop %v643
  %v645 = vmul.f32 %v568, 1.442695
  %v646 = vpow.pop %v645
  %v647 = vmul.f32 %v569, 1.442695
  %v648 = vpow.pop %v647
  %v649 = vmul.f32 %v570, 1.442695
  %v650 = vpow.pop %v649
  %v651 = vmul.f32 %v571, 1.442695
  %v652 = vpow.pop %v651
  %v653 = vmul.f32 %v572, 1.442695
  %v654 = vpow.pop %v653
  %v655 = vmul.f32 %v573, 1.442695
  %v656 = vpow.pop %v655
  %v657 = vmul.f32 %v574, 1.442695
  %v658 = vpow.pop %v657
  %v659 = vmul.f32 %v575, 1.442695
  %v660 = vpow.pop %v659
  %v661 = vmul.f32 %v576, 1.442695
  %v662 = vpow.pop %v661
  %v663 = vmul.f32 %v577, 1.442695
  %v664 = vpow.pop %v663
  %v665 = vmul.f32 %v578, 1.442695
  %v666 = vpow.pop %v665
  %v667 = vmul.f32 %v579, 1.442695
  %v668 = vpow.pop %v667
  %v669 = vmul.f32 %v580, 1.442695
  %v670 = vpow.pop %v669
  %v671 = vmul.f32 %v581, 1.442695
  %v672 = vpow.pop %v671
  %v673 = vmul.f32 %v582, 1.442695
  %v674 = vpow.pop %v673
  %v675 = vmul.f32 %v583, 1.442695
  %v676 = vpow.pop %v675
  %v677 = vmul.f32 %v584, 1.442695
  %v678 = vpow.pop %v677
  %v679 = vmul.f32 %v585, 1.442695
  %v680 = vpow.pop %v679
  %v681 = vmul.f32 %v586, 1.442695
  %v682 = vpow.pop %v681
  %v683 = vmul.f32 %v587, 1.442695
  %v684 = vpow.pop %v683
  %v685 = vmul.f32 %v588, 1.442695
  %v686 = vpow.pop %v685
  %v687 = vmul.f32 %v589, 1.442695
  %v688 = vpow.pop %v687
  %v689 = vmul.f32 %v590, 1.442695
  %v690 = vpow.pop %v689
  %v691 = vmul.f32 %v591, 1.442695
  %v692 = vpow.pop %v691
  %v693 = vmul.f32 %v592, 1.442695
  %v694 = vpow.pop %v693
  %v695 = vmul.f32 %v593, 1.442695
  %v696 = vpow.pop %v695
  %v697 = vmul.f32 %v594, 1.442695
  %v698 = vpow.pop %v697
  %v699 = vmul.f32 %v595, 1.442695
  %v700 = vpow.pop %v699
  %v701 = vmul.f32 %v596, 1.442695
  %v702 = vpow.pop %v701
  %v703 = vmul.f32 %v597, 1.442695
  %v704 = vpow.pop %v703
  %v705 = vmul.f32 %v598, 1.442695
  %v706 = vpow.pop %v705
  %v707 = vmul.f32 %v599, 1.442695
  %v708 = vpow.pop %v707
  %v709 = vmul.f32 %v600, 1.442695
  %v710 = vpow.pop %v709
  %v711 = vmul.f32 %v601, 1.442695
  %v712 = vpow.pop %v711
  %v713 = vmul.f32 %v602, 1.442695
  %v714 = vpow.pop %v713
  %v715 = vmul.f32 %v603, 1.442695
  %v716 = vpow.pop %v715
  %v717 = vmul.f32 %v604, 1.442695
  %v718 = vpow.pop %v717
  %v719 = vmul.f32 %v605, 1.442695
  %v720 = vpow.pop %v719
  %v721 = vmul.f32 %v606, 1.442695
  %v722 = vpow.pop %v721
  %v723 = vmul.f32 %v607, 1.442695
  %v724 = vpow.pop %v723
  %v725 = vmul.f32 %v608, 1.442695
  %v726 = vpow.pop %v725
  %v727 = vmul.f32 %v609, 1.442695
  %v728 = vpow.pop %v727
  %v729 = vmul.f32 %v610, 1.442695
  %v730 = vpow.pop %v729
  %v731 = vmul.f32 %v611, 1.442695
  %v732 = vpow.pop %v731
  %v733 = vmul.f32 %v612, 1.442695
  %v734 = vpow.pop %v733
  %v735 = vmul.f32 %v613, 1.442695
  %v736 = vpow.pop %v735
  %v737 = vmul.f32 %v614, 1.442695
  %v738 = vpow.pop %v737
  %v739 = vmul.f32 %v615, 1.442695
  %v740 = vpow.pop %v739
  %v741 = vmul.f32 %v616, 1.442695
  %v742 = vpow.pop %v741
  %v743 = vmul.f32 %v617, 1.442695
  %v744 = vpow.pop %v743
  %v745 = vmul.f32 %v618, 1.442695
  %v746 = vpow.pop %v745
  %v747 = vadd.f32 %v620, %v624
  %v748 = vadd.f32 %v747, %v628
  %v749 = vadd.f32 %v748, %v632
  %v750 = vadd.f32 %v749, %v636
  %v751 = vadd.f32 %v750, %v640
  %v752 = vadd.f32 %v751, %v644
  %v753 = vadd.f32 %v752, %v648
  %v754 = vadd.f32 %v753, %v652
  %v755 = vadd.f32 %v754, %v656
  %v756 = vadd.f32 %v755, %v660
  %v757 = vadd.f32 %v756, %v664
  %v758 = vadd.f32 %v757, %v668
  %v759 = vadd.f32 %v758, %v672
  %v760 = vadd.f32 %v759, %v676
  %v761 = vadd.f32 %v760, %v680
  %v762 = vadd.f32 %v761, %v684
  %v763 = vadd.f32 %v762, %v688
  %v764 = vadd.f32 %v763, %v692
  %v765 = vadd.f32 %v764, %v696
  %v766 = vadd.f32 %v765, %v700
  %v767 = vadd.f32 %v766, %v704
  %v768 = vadd.f32 %v767, %v708
  %v769 = vadd.f32 %v768, %v712
  %v770 = vadd.f32 %v769, %v716
  %v771 = vadd.f32 %v770, %v720
  %v772 = vadd.f32 %v771, %v724
  %v773 = vadd.f32 %v772, %v728
  %v774 = vadd.f32 %v773, %v732
  %v775 = vadd.f32 %v774, %v736
  %v776 = vadd.f32 %v775, %v740
  %v777 = vadd.f32 %v776, %v744
  %v778 = vrot.slane %v777, 4
  %v779 = vadd.f32 %v777, %v778
  %v780 = vrot.slane %v779, 2
  %v781 = vadd.f32 %v779, %v780
  %v782 = vrot.slane %v781, 1
  %v783 = vadd.f32 %v781, %v782
  %v784 = vadd.f32 %v622, %v626
  %v785 = vadd.f32 %v784, %v630
  %v786 = vadd.f32 %v785, %v634
  %v787 = vadd.f32 %v786, %v638
  %v788 = vadd.f32 %v787, %v642
  %v789 = vadd.f32 %v788, %v646
  %v790 = vadd.f32 %v789, %v650
  %v791 = vadd.f32 %v790, %v654
  %v792 = vadd.f32 %v791, %v658
  %v793 = vadd.f32 %v792, %v662
  %v794 = vadd.f32 %v793, %v666
  %v795 = vadd.f32 %v794, %v670
  %v796 = vadd.f32 %v795, %v674
  %v797 = vadd.f32 %v796, %v678
  %v798 = vadd.f32 %v797, %v682
  %v799 = vadd.f32 %v798, %v686
  %v800 = vadd.f32 %v799, %v690
  %v801 = vadd.f32 %v800, %v694
  %v802 = vadd.f32 %v801, %v698
  %v803 = vadd.f32 %v802, %v702
  %v804 = vadd.f32 %v803, %v706
  %v805 = vadd.f32 %v804, %v710
  %v806 = vadd.f32 %v805, %v714
  %v807 = vadd.f32 %v806, %v718
  %v808 = vadd.f32 %v807, %v722
  %v809 = vadd.f32 %v808, %v726
  %v810 = vadd.f32 %v809, %v730
  %v811 = vadd.f32 %v810, %v734
  %v812 = vadd.f32 %v811, %v738
  %v813 = vadd.f32 %v812, %v742
  %v814 = vadd.f32 %v813, %v746
  %v815 = vrot.slane %v814, 4
  %v816 = vadd.f32 %v814, %v815
  %v817 = vrot.slane %v816, 2
  %v818 = vadd.f32 %v816, %v817
  %v819 = vrot.slane %v818, 1
  %v820 = vadd.f32 %v818, %v819
  %v822 = vsel %vm42, %v22, 0
  %v825 = vsel %vm42, %v23, 0
  %827 = vmatpush.msra.mxu0 0.0
  %828 = vmatpush.msra.mxu0 0.0
  %829 = vmatpush.msra.mxu0 0.0
  %830 = vmatpush.msra.mxu0 0.0
  %831 = vmatpush.msra.mxu0 0.0
  %832 = vmatpush.msra.mxu0 0.0
  %833 = vmatpush.msra.mxu0 0.0
  %834 = vmatpush.msra.mxu0 0.0
  %835 = vmatpush.msra.mxu0 0.0
  %836 = vmatpush.msra.mxu0 0.0
  %837 = vmatpush.msra.mxu0 0.0
  %838 = vmatpush.msra.mxu0 0.0
  %839 = vmatpush.msra.mxu0 0.0
  %840 = vmatpush.msra.mxu0 0.0
  %841 = vmatpush.msra.mxu0 %v30
  %842 = vmatpush.msra.mxu0 %v28
  %843 = vmatmul.f32.gmra.mxu0 %v822
  %v844 = vpop.f32.mrf.mxu0
  %v845 = vadd.f32 0.0, %v844
  %846 = vmatmul.f32.gmra.mxu0 %v825
  %v847 = vpop.f32.mrf.mxu0
  %v848 = vadd.f32 0.0, %v847
  %849 = vdwg.mxu0
  %850 = vmatpush.msra.mxu0 0.0
  %851 = vmatpush.msra.mxu0 0.0
  %852 = vmatpush.msra.mxu0 0.0
  %853 = vmatpush.msra.mxu0 0.0
  %854 = vmatpush.msra.mxu0 0.0
  %855 = vmatpush.msra.mxu0 0.0
  %856 = vmatpush.msra.mxu0 0.0
  %857 = vmatpush.msra.mxu0 0.0
  %858 = vmatpush.msra.mxu0 0.0
  %859 = vmatpush.msra.mxu0 0.0
  %860 = vmatpush.msra.mxu0 0.0
  %861 = vmatpush.msra.mxu0 0.0
  %862 = vmatpush.msra.mxu0 0.0
  %863 = vmatpush.msra.mxu0 0.0
  %864 = vmatpush.msra.mxu0 %v31
  %865 = vmatpush.msra.mxu0 %v29
  %866 = vmatmul.f32.gmra.mxu0 %v822
  %v867 = vpop.f32.mrf.mxu0
  %v868 = vadd.f32 0.0, %v867
  %869 = vmatmul.f32.gmra.mxu0 %v825
  %v870 = vpop.f32.mrf.mxu0
  %v871 = vadd.f32 0.0, %v870
  %872 = vdwg.mxu0
  %v873 = vpack.c.bf16 %v848, %v845
  %v874 = vpack.c.bf16 %v871, %v868
  %v875 = vpack.c.bf16 %v624, %v620
  %v876 = vpack.c.bf16 %v626, %v622
  %v877 = vpack.c.bf16 %v632, %v628
  %v878 = vpack.c.bf16 %v634, %v630
  %v879 = vpack.c.bf16 %v640, %v636
  %v880 = vpack.c.bf16 %v642, %v638
  %v881 = vpack.c.bf16 %v648, %v644
  %v882 = vpack.c.bf16 %v650, %v646
  %v883 = vpack.c.bf16 %v656, %v652
  %v884 = vpack.c.bf16 %v658, %v654
  %v885 = vpack.c.bf16 %v664, %v660
  %v886 = vpack.c.bf16 %v666, %v662
  %v887 = vpack.c.bf16 %v672, %v668
  %v888 = vpack.c.bf16 %v674, %v670
  %v889 = vpack.c.bf16 %v680, %v676
  %v890 = vpack.c.bf16 %v682, %v678
  %v891 = vpack.c.bf16 %v688, %v684
  %v892 = vpack.c.bf16 %v690, %v686
  %v893 = vpack.c.bf16 %v696, %v692
  %v894 = vpack.c.bf16 %v698, %v694
  %v895 = vpack.c.bf16 %v704, %v700
  %v896 = vpack.c.bf16 %v706, %v702
  %v897 = vpack.c.bf16 %v712, %v708
  %v898 = vpack.c.bf16 %v714, %v710
  %v899 = vpack.c.bf16 %v720, %v716
  %v900 = vpack.c.bf16 %v722, %v718
  %v901 = vpack.c.bf16 %v728, %v724
  %v902 = vpack.c.bf16 %v730, %v726
  %v903 = vpack.c.bf16 %v736, %v732
  %v904 = vpack.c.bf16 %v738, %v734
  %v905 = vpack.c.bf16 %v744, %v740
  %v906 = vpack.c.bf16 %v746, %v742
  %907 = vmatpush.bf16.msra.mxu0 %v889
  %908 = vmatpush.bf16.msra.mxu0 %v887
  %909 = vmatpush.bf16.msra.mxu0 %v885
  %910 = vmatpush.bf16.msra.mxu0 %v883
  %911 = vmatpush.bf16.msra.mxu0 %v881
  %912 = vmatpush.bf16.msra.mxu0 %v879
  %913 = vmatpush.bf16.msra.mxu0 %v877
  %914 = vmatpush.bf16.msra.mxu0 %v875
  %915 = vmatmul.bf16.gmra.mxu0 %v873
  %v916 = vpop.f32.mrf.mxu0
  %v917 = vadd.f32 0.0, %v916
  %v918 = vpop.f32.mrf.mxu0
  %v919 = vadd.f32 0.0, %v918
  %920 = vdwg.mxu0
  %921 = vmatpush.bf16.msra.mxu0 %v905
  %922 = vmatpush.bf16.msra.mxu0 %v903
  %923 = vmatpush.bf16.msra.mxu0 %v901
  %924 = vmatpush.bf16.msra.mxu0 %v899
  %925 = vmatpush.bf16.msra.mxu0 %v897
  %926 = vmatpush.bf16.msra.mxu0 %v895
  %927 = vmatpush.bf16.msra.mxu0 %v893
  %928 = vmatpush.bf16.msra.mxu0 %v891
  %929 = vmatmul.bf16.gmra.mxu0 %v874
  %v930 = vpop.f32.mrf.mxu0
  %v931 = vadd.f32 %v917, %v930
  %v932 = vpop.f32.mrf.mxu0
  %v933 = vadd.f32 %v919, %v932
  %934 = vdwg.mxu0
  %935 = vmatpush.bf16.msra.mxu0 %v890
  %936 = vmatpush.bf16.msra.mxu0 %v888
  %937 = vmatpush.bf16.msra.mxu0 %v886
  %938 = vmatpush.bf16.msra.mxu0 %v884
  %939 = vmatpush.bf16.msra.mxu0 %v882
  %940 = vmatpush.bf16.msra.mxu0 %v880
  %941 = vmatpush.bf16.msra.mxu0 %v878
  %942 = vmatpush.bf16.msra.mxu0 %v876
  %943 = vmatmul.bf16.gmra.mxu0 %v873
  %v944 = vpop.f32.mrf.mxu0
  %v945 = vadd.f32 0.0, %v944
  %v946 = vpop.f32.mrf.mxu0
  %v947 = vadd.f32 0.0, %v946
  %948 = vdwg.mxu0
  %949 = vmatpush.bf16.msra.mxu0 %v906
  %950 = vmatpush.bf16.msra.mxu0 %v904
  %951 = vmatpush.bf16.msra.mxu0 %v902
  %952 = vmatpush.bf16.msra.mxu0 %v900
  %953 = vmatpush.bf16.msra.mxu0 %v898
  %954 = vmatpush.bf16.msra.mxu0 %v896
  %955 = vmatpush.bf16.msra.mxu0 %v894
  %956 = vmatpush.bf16.msra.mxu0 %v892
  %957 = vmatmul.bf16.gmra.mxu0 %v874
  %v958 = vpop.f32.mrf.mxu0
  %v959 = vadd.f32 %v945, %v958
  %v960 = vpop.f32.mrf.mxu0
  %v961 = vadd.f32 %v947, %v960
  %962 = vdwg.mxu0
  %v963 = vrcp.pop %v783
  %v964 = vrcp.pop %v820
  %v965 = vmul.f32 %v931, %v963
  %v966 = vmul.f32 %v959, %v964
  %v967 = vmul.f32 %v933, %v963
  %v968 = vmul.f32 %v961, %v964
  %970 = vset.pattern.permute.xlu0 0
  %971 = vperm.xlu0 %970, %v26
  %v972 = vpop.permute.xlu0 %971
  %975 = vset.pattern.permute.xlu0 0
  %976 = vperm.xlu0 %975, %v27
  %v977 = vpop.permute.xlu0 %976
  %v979 = vadd.f32 %v965, %v972
  %v980 = vadd.f32 %v966, %v972
  %v981 = vadd.f32 %v967, %v977
  %v982 = vadd.f32 %v968, %v977
  %v983 = vadd.f32 %v979, %v28
  %v984 = vadd.f32 %v980, %v29
  %v985 = vadd.f32 %v981, %v30
  %v986 = vadd.f32 %v982, %v31
  %987 = vst [vmem:[%s5] sm:$0xff] %v983
  %988 = vst [vmem:[%s5 + $0x8] sm:$0xff] %v984
  %989 = vst [vmem:[%s5 + $0x10] sm:$0xff] %v985
  %990 = vst [vmem:[%s5 + $0x18] sm:$0xff] %v986
  %s991 = scalar_lea.vmem %s0, 32
  %v992 = vld [vmem:[%s991] sm:$0xff]
  %v993 = vld [vmem:[%s991 + $0x8] sm:$0xff]
  %v994 = vld [vmem:[%s991 + $0x10] sm:$0xff]
  %v995 = vld [vmem:[%s991 + $0x18] sm:$0xff]
  %996 = vmatpush.msra.mxu0 0.0
  %997 = vmatpush.msra.mxu0 0.0
  %998 = vmatpush.msra.mxu0 0.0
  %999 = vmatpush.msra.mxu0 0.0
  %1000 = vmatpush.msra.mxu0 0.0
  %1001 = vmatpush.msra.mxu0 0.0
  %1002 = vmatpush.msra.mxu0 0.0
  %1003 = vmatpush.msra.mxu0 0.0
  %1004 = vmatpush.msra.mxu0 0.0
  %1005 = vmatpush.msra.mxu0 0.0
  %1006 = vmatpush.msra.mxu0 0.0
  %1007 = vmatpush.msra.mxu0 0.0
  %1008 = vmatpush.msra.mxu0 0.0
  %1009 = vmatpush.msra.mxu0 0.0
  %1010 = vmatpush.msra.mxu0 %v994
  %1011 = vmatpush.msra.mxu0 %v992
  %1012 = vmatmul.f32.gmra.mxu0 %v44
  %v1013 = vpop.f32.mrf.mxu0
  %v1014 = vadd.f32 %v35, %v1013
  %1015 = vmatmul.f32.gmra.mxu0 %v47
  %v1016 = vpop.f32.mrf.mxu0
  %v1017 = vadd.f32 %v40, %v1016
  %1018 = vdwg.mxu0
  %1019 = vmatpush.msra.mxu0 0.0
  %1020 = vmatpush.msra.mxu0 0.0
  %1021 = vmatpush.msra.mxu0 0.0
  %1022 = vmatpush.msra.mxu0 0.0
  %1023 = vmatpush.msra.mxu0 0.0
  %1024 = vmatpush.msra.mxu0 0.0
  %1025 = vmatpush.msra.mxu0 0.0
  %1026 = vmatpush.msra.mxu0 0.0
  %1027 = vmatpush.msra.mxu0 0.0
  %1028 = vmatpush.msra.mxu0 0.0
  %1029 = vmatpush.msra.mxu0 0.0
  %1030 = vmatpush.msra.mxu0 0.0
  %1031 = vmatpush.msra.mxu0 0.0
  %1032 = vmatpush.msra.mxu0 0.0
  %1033 = vmatpush.msra.mxu0 %v995
  %1034 = vmatpush.msra.mxu0 %v993
  %1035 = vmatmul.f32.gmra.mxu0 %v44
  %v1036 = vpop.f32.mrf.mxu0
  %v1037 = vadd.f32 %v35, %v1036
  %1038 = vmatmul.f32.gmra.mxu0 %v47
  %v1039 = vpop.f32.mrf.mxu0
  %v1040 = vadd.f32 %v40, %v1039
  %1041 = vdwg.mxu0
  %1042 = vxpose.xlu0.b32.start [1/16] %v992, 128
  %1043 = vxpose.xlu0.b32.cont [2/16] %v994, 128
  %1044 = vxpose.xlu0.b32.cont [3/16] 0.0, 128
  %1045 = vxpose.xlu0.b32.cont [4/16] 0.0, 128
  %1046 = vxpose.xlu0.b32.cont [5/16] 0.0, 128
  %1047 = vxpose.xlu0.b32.cont [6/16] 0.0, 128
  %1048 = vxpose.xlu0.b32.cont [7/16] 0.0, 128
  %1049 = vxpose.xlu0.b32.cont [8/16] 0.0, 128
  %1050 = vxpose.xlu0.b32.cont [9/16] 0.0, 128
  %1051 = vxpose.xlu0.b32.cont [10/16] 0.0, 128
  %1052 = vxpose.xlu0.b32.cont [11/16] 0.0, 128
  %1053 = vxpose.xlu0.b32.cont [12/16] 0.0, 128
  %1054 = vxpose.xlu0.b32.cont [13/16] 0.0, 128
  %1055 = vxpose.xlu0.b32.cont [14/16] 0.0, 128
  %1056 = vxpose.xlu0.b32.cont [15/16] 0.0, 128
  %1057 = vxpose.xlu0.b32.end [16/16] 0.0, 128
  %v1058 = vpop.trf.xlu0
  %v1059 = vpop.trf.xlu0
  %v1060 = vpop.trf.xlu0
  %v1061 = vpop.trf.xlu0
  %v1062 = vpop.trf.xlu0
  %v1063 = vpop.trf.xlu0
  %v1064 = vpop.trf.xlu0
  %v1065 = vpop.trf.xlu0
  %v1066 = vpop.trf.xlu0
  %v1067 = vpop.trf.xlu0
  %v1068 = vpop.trf.xlu0
  %v1069 = vpop.trf.xlu0
  %v1070 = vpop.trf.xlu0
  %v1071 = vpop.trf.xlu0
  %v1072 = vpop.trf.xlu0
  %v1073 = vpop.trf.xlu0
  %1074 = vxpose.xlu0.b32.start [1/16] %v993, 128
  %1075 = vxpose.xlu0.b32.cont [2/16] %v995, 128
  %1076 = vxpose.xlu0.b32.cont [3/16] 0.0, 128
  %1077 = vxpose.xlu0.b32.cont [4/16] 0.0, 128
  %1078 = vxpose.xlu0.b32.cont [5/16] 0.0, 128
  %1079 = vxpose.xlu0.b32.cont [6/16] 0.0, 128
  %1080 = vxpose.xlu0.b32.cont [7/16] 0.0, 128
  %1081 = vxpose.xlu0.b32.cont [8/16] 0.0, 128
  %1082 = vxpose.xlu0.b32.cont [9/16] 0.0, 128
  %1083 = vxpose.xlu0.b32.cont [10/16] 0.0, 128
  %1084 = vxpose.xlu0.b32.cont [11/16] 0.0, 128
  %1085 = vxpose.xlu0.b32.cont [12/16] 0.0, 128
  %1086 = vxpose.xlu0.b32.cont [13/16] 0.0, 128
  %1087 = vxpose.xlu0.b32.cont [14/16] 0.0, 128
  %1088 = vxpose.xlu0.b32.cont [15/16] 0.0, 128
  %1089 = vxpose.xlu0.b32.end [16/16] 0.0, 128
  %v1090 = vpop.trf.xlu0
  %v1091 = vpop.trf.xlu0
  %v1092 = vpop.trf.xlu0
  %v1093 = vpop.trf.xlu0
  %v1094 = vpop.trf.xlu0
  %v1095 = vpop.trf.xlu0
  %v1096 = vpop.trf.xlu0
  %v1097 = vpop.trf.xlu0
  %v1098 = vpop.trf.xlu0
  %v1099 = vpop.trf.xlu0
  %v1100 = vpop.trf.xlu0
  %v1101 = vpop.trf.xlu0
  %v1102 = vpop.trf.xlu0
  %v1103 = vpop.trf.xlu0
  %v1104 = vpop.trf.xlu0
  %v1105 = vpop.trf.xlu0
  %v1107 = vsel %vm42, %v1058, 0
  %v1110 = vsel %vm42, %v1059, 0
  %v1113 = vsel %vm42, %v1060, 0
  %v1116 = vsel %vm42, %v1061, 0
  %v1119 = vsel %vm42, %v1062, 0
  %v1122 = vsel %vm42, %v1063, 0
  %v1125 = vsel %vm42, %v1064, 0
  %v1128 = vsel %vm42, %v1065, 0
  %v1131 = vsel %vm42, %v1066, 0
  %v1134 = vsel %vm42, %v1067, 0
  %v1137 = vsel %vm42, %v1068, 0
  %v1140 = vsel %vm42, %v1069, 0
  %v1143 = vsel %vm42, %v1070, 0
  %v1146 = vsel %vm42, %v1071, 0
  %v1149 = vsel %vm42, %v1072, 0
  %v1152 = vsel %vm42, %v1073, 0
  %v1155 = vsel %vm42, %v1090, 0
  %v1158 = vsel %vm42, %v1091, 0
  %v1161 = vsel %vm42, %v1092, 0
  %v1164 = vsel %vm42, %v1093, 0
  %v1167 = vsel %vm42, %v1094, 0
  %v1170 = vsel %vm42, %v1095, 0
  %v1173 = vsel %vm42, %v1096, 0
  %v1176 = vsel %vm42, %v1097, 0
  %v1179 = vsel %vm42, %v1098, 0
  %v1182 = vsel %vm42, %v1099, 0
  %v1185 = vsel %vm42, %v1100, 0
  %v1188 = vsel %vm42, %v1101, 0
  %v1191 = vsel %vm42, %v1102, 0
  %v1194 = vsel %vm42, %v1103, 0
  %v1197 = vsel %vm42, %v1104, 0
  %v1200 = vsel %vm42, %v1105, 0
  %1202 = vmatpush.msra.mxu0 0.0
  %1203 = vmatpush.msra.mxu0 0.0
  %1204 = vmatpush.msra.mxu0 0.0
  %1205 = vmatpush.msra.mxu0 0.0
  %1206 = vmatpush.msra.mxu0 0.0
  %1207 = vmatpush.msra.mxu0 0.0
  %1208 = vmatpush.msra.mxu0 0.0
  %1209 = vmatpush.msra.mxu0 0.0
  %1210 = vmatpush.msra.mxu0 0.0
  %1211 = vmatpush.msra.mxu0 0.0
  %1212 = vmatpush.msra.mxu0 0.0
  %1213 = vmatpush.msra.mxu0 0.0
  %1214 = vmatpush.msra.mxu0 0.0
  %1215 = vmatpush.msra.mxu0 0.0
  %1216 = vmatpush.msra.mxu0 %v1017
  %1217 = vmatpush.msra.mxu0 %v1014
  %1218 = vmatmul.f32.gmra.mxu0 %v1107
  %v1219 = vpop.f32.mrf.mxu0
  %v1220 = vadd.f32 0.0, %v1219
  %1221 = vmatmul.f32.gmra.mxu0 %v1110
  %v1222 = vpop.f32.mrf.mxu0
  %v1223 = vadd.f32 0.0, %v1222
  %1224 = vmatmul.f32.gmra.mxu0 %v1113
  %v1225 = vpop.f32.mrf.mxu0
  %v1226 = vadd.f32 0.0, %v1225
  %1227 = vmatmul.f32.gmra.mxu0 %v1116
  %v1228 = vpop.f32.mrf.mxu0
  %v1229 = vadd.f32 0.0, %v1228
  %1230 = vmatmul.f32.gmra.mxu0 %v1119
  %v1231 = vpop.f32.mrf.mxu0
  %v1232 = vadd.f32 0.0, %v1231
  %1233 = vmatmul.f32.gmra.mxu0 %v1122
  %v1234 = vpop.f32.mrf.mxu0
  %v1235 = vadd.f32 0.0, %v1234
  %1236 = vmatmul.f32.gmra.mxu0 %v1125
  %v1237 = vpop.f32.mrf.mxu0
  %v1238 = vadd.f32 0.0, %v1237
  %1239 = vmatmul.f32.gmra.mxu0 %v1128
  %v1240 = vpop.f32.mrf.mxu0
  %v1241 = vadd.f32 0.0, %v1240
  %1242 = vmatmul.f32.gmra.mxu0 %v1131
  %v1243 = vpop.f32.mrf.mxu0
  %v1244 = vadd.f32 0.0, %v1243
  %1245 = vmatmul.f32.gmra.mxu0 %v1134
  %v1246 = vpop.f32.mrf.mxu0
  %v1247 = vadd.f32 0.0, %v1246
  %1248 = vmatmul.f32.gmra.mxu0 %v1137
  %v1249 = vpop.f32.mrf.mxu0
  %v1250 = vadd.f32 0.0, %v1249
  %1251 = vmatmul.f32.gmra.mxu0 %v1140
  %v1252 = vpop.f32.mrf.mxu0
  %v1253 = vadd.f32 0.0, %v1252
  %1254 = vmatmul.f32.gmra.mxu0 %v1143
  %v1255 = vpop.f32.mrf.mxu0
  %v1256 = vadd.f32 0.0, %v1255
  %1257 = vmatmul.f32.gmra.mxu0 %v1146
  %v1258 = vpop.f32.mrf.mxu0
  %v1259 = vadd.f32 0.0, %v1258
  %1260 = vmatmul.f32.gmra.mxu0 %v1149
  %v1261 = vpop.f32.mrf.mxu0
  %v1262 = vadd.f32 0.0, %v1261
  %1263 = vmatmul.f32.gmra.mxu0 %v1152
  %v1264 = vpop.f32.mrf.mxu0
  %v1265 = vadd.f32 0.0, %v1264
  %1266 = vmatmul.f32.gmra.mxu0 %v1155
  %v1267 = vpop.f32.mrf.mxu0
  %v1268 = vadd.f32 0.0, %v1267
  %1269 = vmatmul.f32.gmra.mxu0 %v1158
  %v1270 = vpop.f32.mrf.mxu0
  %v1271 = vadd.f32 0.0, %v1270
  %1272 = vmatmul.f32.gmra.mxu0 %v1161
  %v1273 = vpop.f32.mrf.mxu0
  %v1274 = vadd.f32 0.0, %v1273
  %1275 = vmatmul.f32.gmra.mxu0 %v1164
  %v1276 = vpop.f32.mrf.mxu0
  %v1277 = vadd.f32 0.0, %v1276
  %1278 = vmatmul.f32.gmra.mxu0 %v1167
  %v1279 = vpop.f32.mrf.mxu0
  %v1280 = vadd.f32 0.0, %v1279
  %1281 = vmatmul.f32.gmra.mxu0 %v1170
  %v1282 = vpop.f32.mrf.mxu0
  %v1283 = vadd.f32 0.0, %v1282
  %1284 = vmatmul.f32.gmra.mxu0 %v1173
  %v1285 = vpop.f32.mrf.mxu0
  %v1286 = vadd.f32 0.0, %v1285
  %1287 = vmatmul.f32.gmra.mxu0 %v1176
  %v1288 = vpop.f32.mrf.mxu0
  %v1289 = vadd.f32 0.0, %v1288
  %1290 = vmatmul.f32.gmra.mxu0 %v1179
  %v1291 = vpop.f32.mrf.mxu0
  %v1292 = vadd.f32 0.0, %v1291
  %1293 = vmatmul.f32.gmra.mxu0 %v1182
  %v1294 = vpop.f32.mrf.mxu0
  %v1295 = vadd.f32 0.0, %v1294
  %1296 = vmatmul.f32.gmra.mxu0 %v1185
  %v1297 = vpop.f32.mrf.mxu0
  %v1298 = vadd.f32 0.0, %v1297
  %1299 = vmatmul.f32.gmra.mxu0 %v1188
  %v1300 = vpop.f32.mrf.mxu0
  %v1301 = vadd.f32 0.0, %v1300
  %1302 = vmatmul.f32.gmra.mxu0 %v1191
  %v1303 = vpop.f32.mrf.mxu0
  %v1304 = vadd.f32 0.0, %v1303
  %1305 = vmatmul.f32.gmra.mxu0 %v1194
  %v1306 = vpop.f32.mrf.mxu0
  %v1307 = vadd.f32 0.0, %v1306
  %1308 = vmatmul.f32.gmra.mxu0 %v1197
  %v1309 = vpop.f32.mrf.mxu0
  %v1310 = vadd.f32 0.0, %v1309
  %1311 = vmatmul.f32.gmra.mxu0 %v1200
  %v1312 = vpop.f32.mrf.mxu0
  %v1313 = vadd.f32 0.0, %v1312
  %1314 = vdwg.mxu0
  %1315 = vmatpush.msra.mxu0 0.0
  %1316 = vmatpush.msra.mxu0 0.0
  %1317 = vmatpush.msra.mxu0 0.0
  %1318 = vmatpush.msra.mxu0 0.0
  %1319 = vmatpush.msra.mxu0 0.0
  %1320 = vmatpush.msra.mxu0 0.0
  %1321 = vmatpush.msra.mxu0 0.0
  %1322 = vmatpush.msra.mxu0 0.0
  %1323 = vmatpush.msra.mxu0 0.0
  %1324 = vmatpush.msra.mxu0 0.0
  %1325 = vmatpush.msra.mxu0 0.0
  %1326 = vmatpush.msra.mxu0 0.0
  %1327 = vmatpush.msra.mxu0 0.0
  %1328 = vmatpush.msra.mxu0 0.0
  %1329 = vmatpush.msra.mxu0 %v1040
  %1330 = vmatpush.msra.mxu0 %v1037
  %1331 = vmatmul.f32.gmra.mxu0 %v1107
  %v1332 = vpop.f32.mrf.mxu0
  %v1333 = vadd.f32 0.0, %v1332
  %1334 = vmatmul.f32.gmra.mxu0 %v1110
  %v1335 = vpop.f32.mrf.mxu0
  %v1336 = vadd.f32 0.0, %v1335
  %1337 = vmatmul.f32.gmra.mxu0 %v1113
  %v1338 = vpop.f32.mrf.mxu0
  %v1339 = vadd.f32 0.0, %v1338
  %1340 = vmatmul.f32.gmra.mxu0 %v1116
  %v1341 = vpop.f32.mrf.mxu0
  %v1342 = vadd.f32 0.0, %v1341
  %1343 = vmatmul.f32.gmra.mxu0 %v1119
  %v1344 = vpop.f32.mrf.mxu0
  %v1345 = vadd.f32 0.0, %v1344
  %1346 = vmatmul.f32.gmra.mxu0 %v1122
  %v1347 = vpop.f32.mrf.mxu0
  %v1348 = vadd.f32 0.0, %v1347
  %1349 = vmatmul.f32.gmra.mxu0 %v1125
  %v1350 = vpop.f32.mrf.mxu0
  %v1351 = vadd.f32 0.0, %v1350
  %1352 = vmatmul.f32.gmra.mxu0 %v1128
  %v1353 = vpop.f32.mrf.mxu0
  %v1354 = vadd.f32 0.0, %v1353
  %1355 = vmatmul.f32.gmra.mxu0 %v1131
  %v1356 = vpop.f32.mrf.mxu0
  %v1357 = vadd.f32 0.0, %v1356
  %1358 = vmatmul.f32.gmra.mxu0 %v1134
  %v1359 = vpop.f32.mrf.mxu0
  %v1360 = vadd.f32 0.0, %v1359
  %1361 = vmatmul.f32.gmra.mxu0 %v1137
  %v1362 = vpop.f32.mrf.mxu0
  %v1363 = vadd.f32 0.0, %v1362
  %1364 = vmatmul.f32.gmra.mxu0 %v1140
  %v1365 = vpop.f32.mrf.mxu0
  %v1366 = vadd.f32 0.0, %v1365
  %1367 = vmatmul.f32.gmra.mxu0 %v1143
  %v1368 = vpop.f32.mrf.mxu0
  %v1369 = vadd.f32 0.0, %v1368
  %1370 = vmatmul.f32.gmra.mxu0 %v1146
  %v1371 = vpop.f32.mrf.mxu0
  %v1372 = vadd.f32 0.0, %v1371
  %1373 = vmatmul.f32.gmra.mxu0 %v1149
  %v1374 = vpop.f32.mrf.mxu0
  %v1375 = vadd.f32 0.0, %v1374
  %1376 = vmatmul.f32.gmra.mxu0 %v1152
  %v1377 = vpop.f32.mrf.mxu0
  %v1378 = vadd.f32 0.0, %v1377
  %1379 = vmatmul.f32.gmra.mxu0 %v1155
  %v1380 = vpop.f32.mrf.mxu0
  %v1381 = vadd.f32 0.0, %v1380
  %1382 = vmatmul.f32.gmra.mxu0 %v1158
  %v1383 = vpop.f32.mrf.mxu0
  %v1384 = vadd.f32 0.0, %v1383
  %1385 = vmatmul.f32.gmra.mxu0 %v1161
  %v1386 = vpop.f32.mrf.mxu0
  %v1387 = vadd.f32 0.0, %v1386
  %1388 = vmatmul.f32.gmra.mxu0 %v1164
  %v1389 = vpop.f32.mrf.mxu0
  %v1390 = vadd.f32 0.0, %v1389
  %1391 = vmatmul.f32.gmra.mxu0 %v1167
  %v1392 = vpop.f32.mrf.mxu0
  %v1393 = vadd.f32 0.0, %v1392
  %1394 = vmatmul.f32.gmra.mxu0 %v1170
  %v1395 = vpop.f32.mrf.mxu0
  %v1396 = vadd.f32 0.0, %v1395
  %1397 = vmatmul.f32.gmra.mxu0 %v1173
  %v1398 = vpop.f32.mrf.mxu0
  %v1399 = vadd.f32 0.0, %v1398
  %1400 = vmatmul.f32.gmra.mxu0 %v1176
  %v1401 = vpop.f32.mrf.mxu0
  %v1402 = vadd.f32 0.0, %v1401
  %1403 = vmatmul.f32.gmra.mxu0 %v1179
  %v1404 = vpop.f32.mrf.mxu0
  %v1405 = vadd.f32 0.0, %v1404
  %1406 = vmatmul.f32.gmra.mxu0 %v1182
  %v1407 = vpop.f32.mrf.mxu0
  %v1408 = vadd.f32 0.0, %v1407
  %1409 = vmatmul.f32.gmra.mxu0 %v1185
  %v1410 = vpop.f32.mrf.mxu0
  %v1411 = vadd.f32 0.0, %v1410
  %1412 = vmatmul.f32.gmra.mxu0 %v1188
  %v1413 = vpop.f32.mrf.mxu0
  %v1414 = vadd.f32 0.0, %v1413
  %1415 = vmatmul.f32.gmra.mxu0 %v1191
  %v1416 = vpop.f32.mrf.mxu0
  %v1417 = vadd.f32 0.0, %v1416
  %1418 = vmatmul.f32.gmra.mxu0 %v1194
  %v1419 = vpop.f32.mrf.mxu0
  %v1420 = vadd.f32 0.0, %v1419
  %1421 = vmatmul.f32.gmra.mxu0 %v1197
  %v1422 = vpop.f32.mrf.mxu0
  %v1423 = vadd.f32 0.0, %v1422
  %1424 = vmatmul.f32.gmra.mxu0 %v1200
  %v1425 = vpop.f32.mrf.mxu0
  %v1426 = vadd.f32 0.0, %v1425
  %1427 = vdwg.mxu0
  %v1428 = vmax.f32 %v1220, %v1226
  %v1429 = vmax.f32 %v1223, %v1229
  %v1430 = vmax.f32 %v1428, %v1232
  %v1431 = vmax.f32 %v1429, %v1235
  %v1432 = vmax.f32 %v1430, %v1238
  %v1433 = vmax.f32 %v1431, %v1241
  %v1434 = vmax.f32 %v1432, %v1244
  %v1435 = vmax.f32 %v1433, %v1247
  %v1436 = vmax.f32 %v1434, %v1250
  %v1437 = vmax.f32 %v1435, %v1253
  %v1438 = vmax.f32 %v1436, %v1256
  %v1439 = vmax.f32 %v1437, %v1259
  %v1440 = vmax.f32 %v1438, %v1262
  %v1441 = vmax.f32 %v1439, %v1265
  %v1442 = vmax.f32 %v1440, %v1268
  %v1443 = vmax.f32 %v1441, %v1271
  %v1444 = vmax.f32 %v1442, %v1274
  %v1445 = vmax.f32 %v1443, %v1277
  %v1446 = vmax.f32 %v1444, %v1280
  %v1447 = vmax.f32 %v1445, %v1283
  %v1448 = vmax.f32 %v1446, %v1286
  %v1449 = vmax.f32 %v1447, %v1289
  %v1450 = vmax.f32 %v1448, %v1292
  %v1451 = vmax.f32 %v1449, %v1295
  %v1452 = vmax.f32 %v1450, %v1298
  %v1453 = vmax.f32 %v1451, %v1301
  %v1454 = vmax.f32 %v1452, %v1304
  %v1455 = vmax.f32 %v1453, %v1307
  %v1456 = vmax.f32 %v1454, %v1310
  %v1457 = vmax.f32 %v1455, %v1313
  %v1458 = vmax.f32 %v1456, %v1457
  %v1459 = vrot.slane %v1458, 4
  %v1460 = vmax.f32 %v1458, %v1459
  %v1461 = vrot.slane %v1460, 2
  %v1462 = vmax.f32 %v1460, %v1461
  %v1463 = vrot.slane %v1462, 1
  %v1464 = vmax.f32 %v1462, %v1463
  %v1465 = vmax.f32 %v1333, %v1339
  %v1466 = vmax.f32 %v1336, %v1342
  %v1467 = vmax.f32 %v1465, %v1345
  %v1468 = vmax.f32 %v1466, %v1348
  %v1469 = vmax.f32 %v1467, %v1351
  %v1470 = vmax.f32 %v1468, %v1354
  %v1471 = vmax.f32 %v1469, %v1357
  %v1472 = vmax.f32 %v1470, %v1360
  %v1473 = vmax.f32 %v1471, %v1363
  %v1474 = vmax.f32 %v1472, %v1366
  %v1475 = vmax.f32 %v1473, %v1369
  %v1476 = vmax.f32 %v1474, %v1372
  %v1477 = vmax.f32 %v1475, %v1375
  %v1478 = vmax.f32 %v1476, %v1378
  %v1479 = vmax.f32 %v1477, %v1381
  %v1480 = vmax.f32 %v1478, %v1384
  %v1481 = vmax.f32 %v1479, %v1387
  %v1482 = vmax.f32 %v1480, %v1390
  %v1483 = vmax.f32 %v1481, %v1393
  %v1484 = vmax.f32 %v1482, %v1396
  %v1485 = vmax.f32 %v1483, %v1399
  %v1486 = vmax.f32 %v1484, %v1402
  %v1487 = vmax.f32 %v1485, %v1405
  %v1488 = vmax.f32 %v1486, %v1408
  %v1489 = vmax.f32 %v1487, %v1411
  %v1490 = vmax.f32 %v1488, %v1414
  %v1491 = vmax.f32 %v1489, %v1417
  %v1492 = vmax.f32 %v1490, %v1420
  %v1493 = vmax.f32 %v1491, %v1423
  %v1494 = vmax.f32 %v1492, %v1426
  %v1495 = vmax.f32 %v1493, %v1494
  %v1496 = vrot.slane %v1495, 4
  %v1497 = vmax.f32 %v1495, %v1496
  %v1498 = vrot.slane %v1497, 2
  %v1499 = vmax.f32 %v1497, %v1498
  %v1500 = vrot.slane %v1499, 1
  %v1501 = vmax.f32 %v1499, %v1500
  %v1502 = vsub.f32 %v1220, %v1464
  %v1503 = vsub.f32 %v1333, %v1501
  %v1504 = vsub.f32 %v1223, %v1464
  %v1505 = vsub.f32 %v1336, %v1501
  %v1506 = vsub.f32 %v1226, %v1464
  %v1507 = vsub.f32 %v1339, %v1501
  %v1508 = vsub.f32 %v1229, %v1464
  %v1509 = vsub.f32 %v1342, %v1501
  %v1510 = vsub.f32 %v1232, %v1464
  %v1511 = vsub.f32 %v1345, %v1501
  %v1512 = vsub.f32 %v1235, %v1464
  %v1513 = vsub.f32 %v1348, %v1501
  %v1514 = vsub.f32 %v1238, %v1464
  %v1515 = vsub.f32 %v1351, %v1501
  %v1516 = vsub.f32 %v1241, %v1464
  %v1517 = vsub.f32 %v1354, %v1501
  %v1518 = vsub.f32 %v1244, %v1464
  %v1519 = vsub.f32 %v1357, %v1501
  %v1520 = vsub.f32 %v1247, %v1464
  %v1521 = vsub.f32 %v1360, %v1501
  %v1522 = vsub.f32 %v1250, %v1464
  %v1523 = vsub.f32 %v1363, %v1501
  %v1524 = vsub.f32 %v1253, %v1464
  %v1525 = vsub.f32 %v1366, %v1501
  %v1526 = vsub.f32 %v1256, %v1464
  %v1527 = vsub.f32 %v1369, %v1501
  %v1528 = vsub.f32 %v1259, %v1464
  %v1529 = vsub.f32 %v1372, %v1501
  %v1530 = vsub.f32 %v1262, %v1464
  %v1531 = vsub.f32 %v1375, %v1501
  %v1532 = vsub.f32 %v1265, %v1464
  %v1533 = vsub.f32 %v1378, %v1501
  %v1534 = vsub.f32 %v1268, %v1464
  %v1535 = vsub.f32 %v1381, %v1501
  %v1536 = vsub.f32 %v1271, %v1464
  %v1537 = vsub.f32 %v1384, %v1501
  %v1538 = vsub.f32 %v1274, %v1464
  %v1539 = vsub.f32 %v1387, %v1501
  %v1540 = vsub.f32 %v1277, %v1464
  %v1541 = vsub.f32 %v1390, %v1501
  %v1542 = vsub.f32 %v1280, %v1464
  %v1543 = vsub.f32 %v1393, %v1501
  %v1544 = vsub.f32 %v1283, %v1464
  %v1545 = vsub.f32 %v1396, %v1501
  %v1546 = vsub.f32 %v1286, %v1464
  %v1547 = vsub.f32 %v1399, %v1501
  %v1548 = vsub.f32 %v1289, %v1464
  %v1549 = vsub.f32 %v1402, %v1501
  %v1550 = vsub.f32 %v1292, %v1464
  %v1551 = vsub.f32 %v1405, %v1501
  %v1552 = vsub.f32 %v1295, %v1464
  %v1553 = vsub.f32 %v1408, %v1501
  %v1554 = vsub.f32 %v1298, %v1464
  %v1555 = vsub.f32 %v1411, %v1501
  %v1556 = vsub.f32 %v1301, %v1464
  %v1557 = vsub.f32 %v1414, %v1501
  %v1558 = vsub.f32 %v1304, %v1464
  %v1559 = vsub.f32 %v1417, %v1501
  %v1560 = vsub.f32 %v1307, %v1464
  %v1561 = vsub.f32 %v1420, %v1501
  %v1562 = vsub.f32 %v1310, %v1464
  %v1563 = vsub.f32 %v1423, %v1501
  %v1564 = vsub.f32 %v1313, %v1464
  %v1565 = vsub.f32 %v1426, %v1501
  %v1566 = vmul.f32 %v1502, 1.442695
  %v1567 = vpow.pop %v1566
  %v1568 = vmul.f32 %v1503, 1.442695
  %v1569 = vpow.pop %v1568
  %v1570 = vmul.f32 %v1504, 1.442695
  %v1571 = vpow.pop %v1570
  %v1572 = vmul.f32 %v1505, 1.442695
  %v1573 = vpow.pop %v1572
  %v1574 = vmul.f32 %v1506, 1.442695
  %v1575 = vpow.pop %v1574
  %v1576 = vmul.f32 %v1507, 1.442695
  %v1577 = vpow.pop %v1576
  %v1578 = vmul.f32 %v1508, 1.442695
  %v1579 = vpow.pop %v1578
  %v1580 = vmul.f32 %v1509, 1.442695
  %v1581 = vpow.pop %v1580
  %v1582 = vmul.f32 %v1510, 1.442695
  %v1583 = vpow.pop %v1582
  %v1584 = vmul.f32 %v1511, 1.442695
  %v1585 = vpow.pop %v1584
  %v1586 = vmul.f32 %v1512, 1.442695
  %v1587 = vpow.pop %v1586
  %v1588 = vmul.f32 %v1513, 1.442695
  %v1589 = vpow.pop %v1588
  %v1590 = vmul.f32 %v1514, 1.442695
  %v1591 = vpow.pop %v1590
  %v1592 = vmul.f32 %v1515, 1.442695
  %v1593 = vpow.pop %v1592
  %v1594 = vmul.f32 %v1516, 1.442695
  %v1595 = vpow.pop %v1594
  %v1596 = vmul.f32 %v1517, 1.442695
  %v1597 = vpow.pop %v1596
  %v1598 = vmul.f32 %v1518, 1.442695
  %v1599 = vpow.pop %v1598
  %v1600 = vmul.f32 %v1519, 1.442695
  %v1601 = vpow.pop %v1600
  %v1602 = vmul.f32 %v1520, 1.442695
  %v1603 = vpow.pop %v1602
  %v1604 = vmul.f32 %v1521, 1.442695
  %v1605 = vpow.pop %v1604
  %v1606 = vmul.f32 %v1522, 1.442695
  %v1607 = vpow.pop %v1606
  %v1608 = vmul.f32 %v1523, 1.442695
  %v1609 = vpow.pop %v1608
  %v1610 = vmul.f32 %v1524, 1.442695
  %v1611 = vpow.pop %v1610
  %v1612 = vmul.f32 %v1525, 1.442695
  %v1613 = vpow.pop %v1612
  %v1614 = vmul.f32 %v1526, 1.442695
  %v1615 = vpow.pop %v1614
  %v1616 = vmul.f32 %v1527, 1.442695
  %v1617 = vpow.pop %v1616
  %v1618 = vmul.f32 %v1528, 1.442695
  %v1619 = vpow.pop %v1618
  %v1620 = vmul.f32 %v1529, 1.442695
  %v1621 = vpow.pop %v1620
  %v1622 = vmul.f32 %v1530, 1.442695
  %v1623 = vpow.pop %v1622
  %v1624 = vmul.f32 %v1531, 1.442695
  %v1625 = vpow.pop %v1624
  %v1626 = vmul.f32 %v1532, 1.442695
  %v1627 = vpow.pop %v1626
  %v1628 = vmul.f32 %v1533, 1.442695
  %v1629 = vpow.pop %v1628
  %v1630 = vmul.f32 %v1534, 1.442695
  %v1631 = vpow.pop %v1630
  %v1632 = vmul.f32 %v1535, 1.442695
  %v1633 = vpow.pop %v1632
  %v1634 = vmul.f32 %v1536, 1.442695
  %v1635 = vpow.pop %v1634
  %v1636 = vmul.f32 %v1537, 1.442695
  %v1637 = vpow.pop %v1636
  %v1638 = vmul.f32 %v1538, 1.442695
  %v1639 = vpow.pop %v1638
  %v1640 = vmul.f32 %v1539, 1.442695
  %v1641 = vpow.pop %v1640
  %v1642 = vmul.f32 %v1540, 1.442695
  %v1643 = vpow.pop %v1642
  %v1644 = vmul.f32 %v1541, 1.442695
  %v1645 = vpow.pop %v1644
  %v1646 = vmul.f32 %v1542, 1.442695
  %v1647 = vpow.pop %v1646
  %v1648 = vmul.f32 %v1543, 1.442695
  %v1649 = vpow.pop %v1648
  %v1650 = vmul.f32 %v1544, 1.442695
  %v1651 = vpow.pop %v1650
  %v1652 = vmul.f32 %v1545, 1.442695
  %v1653 = vpow.pop %v1652
  %v1654 = vmul.f32 %v1546, 1.442695
  %v1655 = vpow.pop %v1654
  %v1656 = vmul.f32 %v1547, 1.442695
  %v1657 = vpow.pop %v1656
  %v1658 = vmul.f32 %v1548, 1.442695
  %v1659 = vpow.pop %v1658
  %v1660 = vmul.f32 %v1549, 1.442695
  %v1661 = vpow.pop %v1660
  %v1662 = vmul.f32 %v1550, 1.442695
  %v1663 = vpow.pop %v1662
  %v1664 = vmul.f32 %v1551, 1.442695
  %v1665 = vpow.pop %v1664
  %v1666 = vmul.f32 %v1552, 1.442695
  %v1667 = vpow.pop %v1666
  %v1668 = vmul.f32 %v1553, 1.442695
  %v1669 = vpow.pop %v1668
  %v1670 = vmul.f32 %v1554, 1.442695
  %v1671 = vpow.pop %v1670
  %v1672 = vmul.f32 %v1555, 1.442695
  %v1673 = vpow.pop %v1672
  %v1674 = vmul.f32 %v1556, 1.442695
  %v1675 = vpow.pop %v1674
  %v1676 = vmul.f32 %v1557, 1.442695
  %v1677 = vpow.pop %v1676
  %v1678 = vmul.f32 %v1558, 1.442695
  %v1679 = vpow.pop %v1678
  %v1680 = vmul.f32 %v1559, 1.442695
  %v1681 = vpow.pop %v1680
  %v1682 = vmul.f32 %v1560, 1.442695
  %v1683 = vpow.pop %v1682
  %v1684 = vmul.f32 %v1561, 1.442695
  %v1685 = vpow.pop %v1684
  %v1686 = vmul.f32 %v1562, 1.442695
  %v1687 = vpow.pop %v1686
  %v1688 = vmul.f32 %v1563, 1.442695
  %v1689 = vpow.pop %v1688
  %v1690 = vmul.f32 %v1564, 1.442695
  %v1691 = vpow.pop %v1690
  %v1692 = vmul.f32 %v1565, 1.442695
  %v1693 = vpow.pop %v1692
  %v1694 = vadd.f32 %v1567, %v1571
  %v1695 = vadd.f32 %v1694, %v1575
  %v1696 = vadd.f32 %v1695, %v1579
  %v1697 = vadd.f32 %v1696, %v1583
  %v1698 = vadd.f32 %v1697, %v1587
  %v1699 = vadd.f32 %v1698, %v1591
  %v1700 = vadd.f32 %v1699, %v1595
  %v1701 = vadd.f32 %v1700, %v1599
  %v1702 = vadd.f32 %v1701, %v1603
  %v1703 = vadd.f32 %v1702, %v1607
  %v1704 = vadd.f32 %v1703, %v1611
  %v1705 = vadd.f32 %v1704, %v1615
  %v1706 = vadd.f32 %v1705, %v1619
  %v1707 = vadd.f32 %v1706, %v1623
  %v1708 = vadd.f32 %v1707, %v1627
  %v1709 = vadd.f32 %v1708, %v1631
  %v1710 = vadd.f32 %v1709, %v1635
  %v1711 = vadd.f32 %v1710, %v1639
  %v1712 = vadd.f32 %v1711, %v1643
  %v1713 = vadd.f32 %v1712, %v1647
  %v1714 = vadd.f32 %v1713, %v1651
  %v1715 = vadd.f32 %v1714, %v1655
  %v1716 = vadd.f32 %v1715, %v1659
  %v1717 = vadd.f32 %v1716, %v1663
  %v1718 = vadd.f32 %v1717, %v1667
  %v1719 = vadd.f32 %v1718, %v1671
  %v1720 = vadd.f32 %v1719, %v1675
  %v1721 = vadd.f32 %v1720, %v1679
  %v1722 = vadd.f32 %v1721, %v1683
  %v1723 = vadd.f32 %v1722, %v1687
  %v1724 = vadd.f32 %v1723, %v1691
  %v1725 = vrot.slane %v1724, 4
  %v1726 = vadd.f32 %v1724, %v1725
  %v1727 = vrot.slane %v1726, 2
  %v1728 = vadd.f32 %v1726, %v1727
  %v1729 = vrot.slane %v1728, 1
  %v1730 = vadd.f32 %v1728, %v1729
  %v1731 = vadd.f32 %v1569, %v1573
  %v1732 = vadd.f32 %v1731, %v1577
  %v1733 = vadd.f32 %v1732, %v1581
  %v1734 = vadd.f32 %v1733, %v1585
  %v1735 = vadd.f32 %v1734, %v1589
  %v1736 = vadd.f32 %v1735, %v1593
  %v1737 = vadd.f32 %v1736, %v1597
  %v1738 = vadd.f32 %v1737, %v1601
  %v1739 = vadd.f32 %v1738, %v1605
  %v1740 = vadd.f32 %v1739, %v1609
  %v1741 = vadd.f32 %v1740, %v1613
  %v1742 = vadd.f32 %v1741, %v1617
  %v1743 = vadd.f32 %v1742, %v1621
  %v1744 = vadd.f32 %v1743, %v1625
  %v1745 = vadd.f32 %v1744, %v1629
  %v1746 = vadd.f32 %v1745, %v1633
  %v1747 = vadd.f32 %v1746, %v1637
  %v1748 = vadd.f32 %v1747, %v1641
  %v1749 = vadd.f32 %v1748, %v1645
  %v1750 = vadd.f32 %v1749, %v1649
  %v1751 = vadd.f32 %v1750, %v1653
  %v1752 = vadd.f32 %v1751, %v1657
  %v1753 = vadd.f32 %v1752, %v1661
  %v1754 = vadd.f32 %v1753, %v1665
  %v1755 = vadd.f32 %v1754, %v1669
  %v1756 = vadd.f32 %v1755, %v1673
  %v1757 = vadd.f32 %v1756, %v1677
  %v1758 = vadd.f32 %v1757, %v1681
  %v1759 = vadd.f32 %v1758, %v1685
  %v1760 = vadd.f32 %v1759, %v1689
  %v1761 = vadd.f32 %v1760, %v1693
  %v1762 = vrot.slane %v1761, 4
  %v1763 = vadd.f32 %v1761, %v1762
  %v1764 = vrot.slane %v1763, 2
  %v1765 = vadd.f32 %v1763, %v1764
  %v1766 = vrot.slane %v1765, 1
  %v1767 = vadd.f32 %v1765, %v1766
  %1768 = vmatpush.msra.mxu0 0.0
  %1769 = vmatpush.msra.mxu0 0.0
  %1770 = vmatpush.msra.mxu0 0.0
  %1771 = vmatpush.msra.mxu0 0.0
  %1772 = vmatpush.msra.mxu0 0.0
  %1773 = vmatpush.msra.mxu0 0.0
  %1774 = vmatpush.msra.mxu0 0.0
  %1775 = vmatpush.msra.mxu0 0.0
  %1776 = vmatpush.msra.mxu0 0.0
  %1777 = vmatpush.msra.mxu0 0.0
  %1778 = vmatpush.msra.mxu0 0.0
  %1779 = vmatpush.msra.mxu0 0.0
  %1780 = vmatpush.msra.mxu0 0.0
  %1781 = vmatpush.msra.mxu0 0.0
  %1782 = vmatpush.msra.mxu0 %v994
  %1783 = vmatpush.msra.mxu0 %v992
  %1784 = vmatmul.f32.gmra.mxu0 %v822
  %v1785 = vpop.f32.mrf.mxu0
  %v1786 = vadd.f32 0.0, %v1785
  %1787 = vmatmul.f32.gmra.mxu0 %v825
  %v1788 = vpop.f32.mrf.mxu0
  %v1789 = vadd.f32 0.0, %v1788
  %1790 = vdwg.mxu0
  %1791 = vmatpush.msra.mxu0 0.0
  %1792 = vmatpush.msra.mxu0 0.0
  %1793 = vmatpush.msra.mxu0 0.0
  %1794 = vmatpush.msra.mxu0 0.0
  %1795 = vmatpush.msra.mxu0 0.0
  %1796 = vmatpush.msra.mxu0 0.0
  %1797 = vmatpush.msra.mxu0 0.0
  %1798 = vmatpush.msra.mxu0 0.0
  %1799 = vmatpush.msra.mxu0 0.0
  %1800 = vmatpush.msra.mxu0 0.0
  %1801 = vmatpush.msra.mxu0 0.0
  %1802 = vmatpush.msra.mxu0 0.0
  %1803 = vmatpush.msra.mxu0 0.0
  %1804 = vmatpush.msra.mxu0 0.0
  %1805 = vmatpush.msra.mxu0 %v995
  %1806 = vmatpush.msra.mxu0 %v993
  %1807 = vmatmul.f32.gmra.mxu0 %v822
  %v1808 = vpop.f32.mrf.mxu0
  %v1809 = vadd.f32 0.0, %v1808
  %1810 = vmatmul.f32.gmra.mxu0 %v825
  %v1811 = vpop.f32.mrf.mxu0
  %v1812 = vadd.f32 0.0, %v1811
  %1813 = vdwg.mxu0
  %v1814 = vpack.c.bf16 %v1789, %v1786
  %v1815 = vpack.c.bf16 %v1812, %v1809
  %v1816 = vpack.c.bf16 %v1571, %v1567
  %v1817 = vpack.c.bf16 %v1573, %v1569
  %v1818 = vpack.c.bf16 %v1579, %v1575
  %v1819 = vpack.c.bf16 %v1581, %v1577
  %v1820 = vpack.c.bf16 %v1587, %v1583
  %v1821 = vpack.c.bf16 %v1589, %v1585
  %v1822 = vpack.c.bf16 %v1595, %v1591
  %v1823 = vpack.c.bf16 %v1597, %v1593
  %v1824 = vpack.c.bf16 %v1603, %v1599
  %v1825 = vpack.c.bf16 %v1605, %v1601
  %v1826 = vpack.c.bf16 %v1611, %v1607
  %v1827 = vpack.c.bf16 %v1613, %v1609
  %v1828 = vpack.c.bf16 %v1619, %v1615
  %v1829 = vpack.c.bf16 %v1621, %v1617
  %v1830 = vpack.c.bf16 %v1627, %v1623
  %v1831 = vpack.c.bf16 %v1629, %v1625
  %v1832 = vpack.c.bf16 %v1635, %v1631
  %v1833 = vpack.c.bf16 %v1637, %v1633
  %v1834 = vpack.c.bf16 %v1643, %v1639
  %v1835 = vpack.c.bf16 %v1645, %v1641
  %v1836 = vpack.c.bf16 %v1651, %v1647
  %v1837 = vpack.c.bf16 %v1653, %v1649
  %v1838 = vpack.c.bf16 %v1659, %v1655
  %v1839 = vpack.c.bf16 %v1661, %v1657
  %v1840 = vpack.c.bf16 %v1667, %v1663
  %v1841 = vpack.c.bf16 %v1669, %v1665
  %v1842 = vpack.c.bf16 %v1675, %v1671
  %v1843 = vpack.c.bf16 %v1677, %v1673
  %v1844 = vpack.c.bf16 %v1683, %v1679
  %v1845 = vpack.c.bf16 %v1685, %v1681
  %v1846 = vpack.c.bf16 %v1691, %v1687
  %v1847 = vpack.c.bf16 %v1693, %v1689
  %1848 = vmatpush.bf16.msra.mxu0 %v1830
  %1849 = vmatpush.bf16.msra.mxu0 %v1828
  %1850 = vmatpush.bf16.msra.mxu0 %v1826
  %1851 = vmatpush.bf16.msra.mxu0 %v1824
  %1852 = vmatpush.bf16.msra.mxu0 %v1822
  %1853 = vmatpush.bf16.msra.mxu0 %v1820
  %1854 = vmatpush.bf16.msra.mxu0 %v1818
  %1855 = vmatpush.bf16.msra.mxu0 %v1816
  %1856 = vmatmul.bf16.gmra.mxu0 %v1814
  %v1857 = vpop.f32.mrf.mxu0
  %v1858 = vadd.f32 0.0, %v1857
  %v1859 = vpop.f32.mrf.mxu0
  %v1860 = vadd.f32 0.0, %v1859
  %1861 = vdwg.mxu0
  %1862 = vmatpush.bf16.msra.mxu0 %v1846
  %1863 = vmatpush.bf16.msra.mxu0 %v1844
  %1864 = vmatpush.bf16.msra.mxu0 %v1842
  %1865 = vmatpush.bf16.msra.mxu0 %v1840
  %1866 = vmatpush.bf16.msra.mxu0 %v1838
  %1867 = vmatpush.bf16.msra.mxu0 %v1836
  %1868 = vmatpush.bf16.msra.mxu0 %v1834
  %1869 = vmatpush.bf16.msra.mxu0 %v1832
  %1870 = vmatmul.bf16.gmra.mxu0 %v1815
  %v1871 = vpop.f32.mrf.mxu0
  %v1872 = vadd.f32 %v1858, %v1871
  %v1873 = vpop.f32.mrf.mxu0
  %v1874 = vadd.f32 %v1860, %v1873
  %1875 = vdwg.mxu0
  %1876 = vmatpush.bf16.msra.mxu0 %v1831
  %1877 = vmatpush.bf16.msra.mxu0 %v1829
  %1878 = vmatpush.bf16.msra.mxu0 %v1827
  %1879 = vmatpush.bf16.msra.mxu0 %v1825
  %1880 = vmatpush.bf16.msra.mxu0 %v1823
  %1881 = vmatpush.bf16.msra.mxu0 %v1821
  %1882 = vmatpush.bf16.msra.mxu0 %v1819
  %1883 = vmatpush.bf16.msra.mxu0 %v1817
  %1884 = vmatmul.bf16.gmra.mxu0 %v1814
  %v1885 = vpop.f32.mrf.mxu0
  %v1886 = vadd.f32 0.0, %v1885
  %v1887 = vpop.f32.mrf.mxu0
  %v1888 = vadd.f32 0.0, %v1887
  %1889 = vdwg.mxu0
  %1890 = vmatpush.bf16.msra.mxu0 %v1847
  %1891 = vmatpush.bf16.msra.mxu0 %v1845
  %1892 = vmatpush.bf16.msra.mxu0 %v1843
  %1893 = vmatpush.bf16.msra.mxu0 %v1841
  %1894 = vmatpush.bf16.msra.mxu0 %v1839
  %1895 = vmatpush.bf16.msra.mxu0 %v1837
  %1896 = vmatpush.bf16.msra.mxu0 %v1835
  %1897 = vmatpush.bf16.msra.mxu0 %v1833
  %1898 = vmatmul.bf16.gmra.mxu0 %v1815
  %v1899 = vpop.f32.mrf.mxu0
  %v1900 = vadd.f32 %v1886, %v1899
  %v1901 = vpop.f32.mrf.mxu0
  %v1902 = vadd.f32 %v1888, %v1901
  %1903 = vdwg.mxu0
  %v1904 = vrcp.pop %v1730
  %v1905 = vrcp.pop %v1767
  %v1906 = vmul.f32 %v1872, %v1904
  %v1907 = vmul.f32 %v1900, %v1905
  %v1908 = vmul.f32 %v1874, %v1904
  %v1909 = vmul.f32 %v1902, %v1905
  %v1910 = vadd.f32 %v1906, %v972
  %v1911 = vadd.f32 %v1907, %v972
  %v1912 = vadd.f32 %v1908, %v977
  %v1913 = vadd.f32 %v1909, %v977
  %v1914 = vadd.f32 %v1910, %v992
  %v1915 = vadd.f32 %v1911, %v993
  %v1916 = vadd.f32 %v1912, %v994
  %v1917 = vadd.f32 %v1913, %v995
  %s1918 = scalar_lea.vmem %s5, 32
  %1919 = vst [vmem:[%s1918] sm:$0xff] %v1914
  %1920 = vst [vmem:[%s1918 + $0x8] sm:$0xff] %v1915
  %1921 = vst [vmem:[%s1918 + $0x10] sm:$0xff] %v1916
  %1922 = vst [vmem:[%s1918 + $0x18] sm:$0xff] %v1917
  // Predicated region
  $region22: #{_pam_forward.1} parent=0 // pred_check
    _
  $region23: #{_pam_forward.1} parent=0 // pred_check_branch
    %1924 = sbr.rel (0) target = $region25
  $region24: #{_pam_forward.1} parent=0 // pred_region
    _
  $region25: #{_pam_forward.1} parent=0 // pred_fallthru
    _
  // Predicated region
  $region26: #{_pam_forward.1} parent=0 // pred_check
    _
  $region27: #{_pam_forward.1} parent=0 // pred_check_branch
    %1926 = sbr.rel (0) target = $region29
  $region28: #{_pam_forward.1} parent=0 // pred_region
    _
  $region29: #{_pam_forward.1} parent=0 // pred_fallthru
    _

</llo_original>
